<compile_context>
chip_gen: v5e
topology: v5e:2x2
jax: 0.10.0
libtpu: 0.0.40
codegen_flags: <defaults>
</compile_context>

<pallas_src>
import functools

import jax
import jax.numpy as jnp
from jax import lax
from jax.experimental import pallas as pl
from jax.experimental.pallas import tpu as pltpu


# CORE_PARALLEL actually splits the batch grid across TensorCores on multi-TC
# chips (v7x); "parallel" vs "arbitrary" has near-zero codegen impact.
_BATCH_GRID_SEMANTICS = getattr(pltpu, "CORE_PARALLEL", "parallel")


# -----------------------------------------------------------------------------
# Kernel: fc1 -> relu -> fc2 -> relu -> (fc3 folded into basis) -> sigmoid
# Weights are PyTorch-style (out_features, in_features); linears are x @ W.T + b
# via dot_general contracting the last dim of both operands.
# -----------------------------------------------------------------------------
def solo_generator_kernel(x_ref, w1_ref, b1_ref, w2_ref, b2_ref,
                          m_ref, bimg_ref, o_ref):
    trans_b = (((1,), (1,)), ((), ()))            # contract last dims (x @ W.T)

    # fc1: (TB,4096) @ (4,4096).T + (1,4), relu — bf16 MXU operands, f32 acc.
    # (x cast is a no-op if the caller already provides bf16 x.)
    x = x_ref[...].astype(jnp.bfloat16)
    h1 = lax.dot_general(x, w1_ref[...], trans_b,
                         preferred_element_type=jnp.float32) + b1_ref[...]
    h1 = jnp.maximum(h1, 0.0)

    # fc2: (TB,4) @ (4,4).T + (1,4), relu — f32 (tiny).
    h2 = lax.dot_general(h1, w2_ref[...], trans_b,
                         preferred_element_type=jnp.float32) + b2_ref[...]
    h2 = jnp.maximum(h2, 0.0)

    # Folded fc3 + einsum('ij,jkl->ikl'): img = h2 @ M + b_img, kept in f32 for
    # fidelity (basis magnitudes ~625 at the corners); K=4 so FLOPs are trivial.
    img = jnp.dot(h2, m_ref[...],
                  preferred_element_type=jnp.float32) + bimg_ref[...]

    # sigmoid via tanh identity: one EUP transcendental, no exp overflow.
    # Math in f32, store narrows to the bf16 output dtype.
    o_ref[...] = (0.5 * (jnp.tanh(0.5 * img) + 1.0)).astype(o_ref.dtype)


def _build_basis():
    """SoloGenerator.construct_image's polynomial basis b, flattened to (15, 4096).

    torch.meshgrid(a, b) (indexing='ij'): x[i,j] = a[i], y[i,j] = b[j] with
    a = linspace(-5,5,64), b = -linspace(-5,5,64).
    """
    lin = jnp.linspace(-5.0, 5.0, 64, dtype=jnp.float32)
    xg = jnp.broadcast_to(lin[:, None], (64, 64))        # x[i,j] = lin[i]
    yg = jnp.broadcast_to((-lin)[None, :], (64, 64))     # y[i,j] = -lin[j]
    terms = [xg ** i * yg ** j for i in range(5) for j in range(5 - i)]  # 15
    return jnp.stack(terms, axis=0).reshape(15, 64 * 64)                 # (15,4096)


def _init_linear(key, in_features, out_features):
    """PyTorch-default-style init U(-1/sqrt(fan_in), 1/sqrt(fan_in)); W is (out, in)."""
    kw, kb = jax.random.split(key)
    bound = 1.0 / (in_features ** 0.5)
    w = jax.random.uniform(kw, (out_features, in_features), jnp.float32,
                           minval=-bound, maxval=bound)
    b = jax.random.uniform(kb, (1, out_features), jnp.float32,
                           minval=-bound, maxval=bound)
    return w, b


@jax.jit
def solo_generator_forward(x, w1, b1, w2, b2, w3, b3, basis):
    hp = jax.lax.Precision.HIGHEST

    # Fold fc3 into the basis (one-time tiny matmuls, kept in full f32).
    m = jnp.dot(w3.T, basis, precision=hp)        # (4, 4096)
    b_img = jnp.dot(b3, basis, precision=hp)      # (1, 4096)
    w1_bf16 = w1.astype(jnp.bfloat16)             # constant block: pre-cast once

    x_flat = x.reshape(-1, 64 * 64)               # x.view(-1, 64**2); bf16 x OK as-is
    B = x_flat.shape[0]

    # Batch tile: whole batch if small (full-dim block is always layout-legal),
    # else 512-row tiles (multiple of 8).  No jnp.pad — Pallas masks the ragged
    # tail block's input/output DMAs, so odd batch sizes cost nothing extra.
    TB = B if B <= 512 else 512
    grid = (pl.cdiv(B, TB),)

    tile_map = lambda i: (i, 0)      # x / out: tiled along batch
    const_map = lambda i: (0, 0)     # params: same block every step (VMEM-resident)

    out_flat = pl.pallas_call(
        solo_generator_kernel,
        out_shape=jax.ShapeDtypeStruct((B, 64 * 64), jnp.bfloat16),
        grid=grid,
        in_specs=[
            pl.BlockSpec((TB, 4096), tile_map),    # x
            pl.BlockSpec((4, 4096), const_map),    # fc1.weight (out, in), bf16
            pl.BlockSpec((1, 4), const_map),       # fc1.bias
            pl.BlockSpec((4, 4), const_map),       # fc2.weight
            pl.BlockSpec((1, 4), const_map),       # fc2.bias
            pl.BlockSpec((4, 4096), const_map),    # M = fc3.W^T @ basis (f32)
            pl.BlockSpec((1, 4096), const_map),    # b_img = fc3.b @ basis (f32)
        ],
        out_specs=pl.BlockSpec((TB, 4096), tile_map),
        compiler_params=pltpu.CompilerParams(
            dimension_semantics=(_BATCH_GRID_SEMANTICS,),
            vmem_limit_bytes=48 * 1024 * 1024,     # fits TB=512 tiles on v7x's 64 MiB
        ),
    )(x_flat, w1_bf16, b1, w2, b2, m, b_img)

    return out_flat.reshape(-1, 64, 64)            # bf16 output


def _reference_forward(x, w1, b1, w2, b2, w3, b3, basis):
    """Pure-JAX f32 reference of the PyTorch module's forward."""
    hp = jax.lax.Precision.HIGHEST
    xf = x.reshape(-1, 64 * 64).astype(jnp.float32)
    h1 = jnp.maximum(jnp.dot(xf, w1.T, precision=hp) + b1, 0.0)
    h2 = jnp.maximum(jnp.dot(h1, w2.T, precision=hp) + b2, 0.0)
    c = jnp.dot(h2, w3.T, precision=hp) + b3
    img = jnp.dot(c, basis, precision=hp)
    return jax.nn.sigmoid(img).reshape(-1, 64, 64)


if __name__ == "__main__":
    key = jax.random.PRNGKey(0)
    k_x, k1, k2, k3 = jax.random.split(key, 4)

    # Small example input consistent with the module: batch=2, NCHW (2, 1, 64, 64).
    x = jax.random.normal(k_x, (2, 1, 64, 64), jnp.float32)

    # Deterministic parameter init (shapes from __init__), PyTorch (out, in) layout.
    w1, b1 = _init_linear(k1, 64 * 64, 4)   # fc1: Linear(4096, 4)
    w2, b2 = _init_linear(k2, 4, 4)         # fc2: Linear(4, 4)
    w3, b3 = _init_linear(k3, 4, 15)        # fc3: Linear(4, 15)
    basis = _build_basis()                  # (15, 4096)

    out = solo_generator_forward(x, w1, b1, w2, b2, w3, b3, basis)
    out = jax.block_until_ready(out)

    assert out.shape == (2, 64, 64), out.shape
    assert out.dtype == jnp.bfloat16, out.dtype
    assert bool(jnp.all(jnp.isfinite(out.astype(jnp.float32))))
    assert bool(jnp.all((out >= 0.0) & (out <= 1.0)))   # sigmoid range

    # Correctness against a pure-JAX f32 reference (bf16 store + bf16 fc1 => ~1e-2).
    ref = jax.block_until_ready(_reference_forward(x, w1, b1, w2, b2, w3, b3, basis))
    max_err = float(jnp.max(jnp.abs(out.astype(jnp.float32) - ref)))
    assert max_err < 2e-2, f"max_err={max_err}"

    print("KERNEL_OK")
</pallas_src>

<mosaic_0001>
module attributes {stable_mosaic.version = 11 : i64} {
  func.func @solo_generator_kernel(%arg0: i32, %arg1: memref<2x4096xf32, #tpu.memory_space<vmem>>, %arg2: memref<4x4096xbf16, #tpu.memory_space<vmem>>, %arg3: memref<1x4xf32, #tpu.memory_space<vmem>>, %arg4: memref<4x4xf32, #tpu.memory_space<vmem>>, %arg5: memref<1x4xf32, #tpu.memory_space<vmem>>, %arg6: memref<4x4096xf32, #tpu.memory_space<vmem>>, %arg7: memref<1x4096xf32, #tpu.memory_space<vmem>>, %arg8: memref<2x4096xbf16, #tpu.memory_space<vmem>>) attributes {dimension_semantics = [#tpu.dimension_semantics<core_parallel>], iteration_bounds = array<i64: 1>, scalar_prefetch = 0 : i64, scratch_operands = 0 : i64, tpu.core_type = #tpu.core_type<tc>, window_params = [{transform_indices = @transform_0, window_bounds = array<i64: 2, 4096>}, {pipeline_mode = #tpu.pipeline_mode<synchronous>, transform_indices = @transform_1, window_bounds = array<i64: 4, 4096>}, {pipeline_mode = #tpu.pipeline_mode<synchronous>, transform_indices = @transform_2, window_bounds = array<i64: 1, 4>}, {pipeline_mode = #tpu.pipeline_mode<synchronous>, transform_indices = @transform_3, window_bounds = array<i64: 4, 4>}, {pipeline_mode = #tpu.pipeline_mode<synchronous>, transform_indices = @transform_4, window_bounds = array<i64: 1, 4>}, {pipeline_mode = #tpu.pipeline_mode<synchronous>, transform_indices = @transform_5, window_bounds = array<i64: 4, 4096>}, {pipeline_mode = #tpu.pipeline_mode<synchronous>, transform_indices = @transform_6, window_bounds = array<i64: 1, 4096>}, {transform_indices = @transform_7, window_bounds = array<i64: 2, 4096>}]} {
    %c0 = arith.constant 0 : index
    %c0_0 = arith.constant 0 : index
    %0 = vector.load %arg1[%c0, %c0_0] : memref<2x4096xf32, #tpu.memory_space<vmem>>, vector<2x4096xf32>
    %1 = arith.truncf %0 : vector<2x4096xf32> to vector<2x4096xbf16>
    %c0_1 = arith.constant 0 : index
    %c0_2 = arith.constant 0 : index
    %2 = vector.load %arg2[%c0_1, %c0_2] : memref<4x4096xbf16, #tpu.memory_space<vmem>>, vector<4x4096xbf16>
    %cst = arith.constant dense<0.000000e+00> : vector<2x4xf32>
    %3 = tpu.matmul %1, %2, %cst {dimension_numbers = #tpu.dot_dimension_numbers<[1], [1], [0], [0], [0, 0, 1, 0], [], []>} : vector<2x4096xbf16>, vector<4x4096xbf16>, vector<2x4xf32> -> vector<2x4xf32>
    %c0_3 = arith.constant 0 : index
    %c0_4 = arith.constant 0 : index
    %4 = vector.load %arg3[%c0_3, %c0_4] : memref<1x4xf32, #tpu.memory_space<vmem>>, vector<1x4xf32>
    %5 = vector.broadcast %4 : vector<1x4xf32> to vector<2x4xf32>
    %6 = arith.addf %3, %5 : vector<2x4xf32>
    %cst_5 = arith.constant 0.000000e+00 : f32
    %7 = vector.broadcast %cst_5 : f32 to vector<2x4xf32>
    %8 = arith.maximumf %6, %7 : vector<2x4xf32>
    %c0_6 = arith.constant 0 : index
    %c0_7 = arith.constant 0 : index
    %9 = vector.load %arg4[%c0_6, %c0_7] : memref<4x4xf32, #tpu.memory_space<vmem>>, vector<4x4xf32>
    %cst_8 = arith.constant dense<0.000000e+00> : vector<2x4xf32>
    %10 = tpu.matmul %8, %9, %cst_8 {dimension_numbers = #tpu.dot_dimension_numbers<[1], [1], [0], [0], [0, 0, 1, 0], [], []>} : vector<2x4xf32>, vector<4x4xf32>, vector<2x4xf32> -> vector<2x4xf32>
    %c0_9 = arith.constant 0 : index
    %c0_10 = arith.constant 0 : index
    %11 = vector.load %arg5[%c0_9, %c0_10] : memref<1x4xf32, #tpu.memory_space<vmem>>, vector<1x4xf32>
    %12 = vector.broadcast %11 : vector<1x4xf32> to vector<2x4xf32>
    %13 = arith.addf %10, %12 : vector<2x4xf32>
    %cst_11 = arith.constant 0.000000e+00 : f32
    %14 = vector.broadcast %cst_11 : f32 to vector<2x4xf32>
    %15 = arith.maximumf %13, %14 : vector<2x4xf32>
    %c0_12 = arith.constant 0 : index
    %c0_13 = arith.constant 0 : index
    %16 = vector.load %arg6[%c0_12, %c0_13] : memref<4x4096xf32, #tpu.memory_space<vmem>>, vector<4x4096xf32>
    %cst_14 = arith.constant dense<0.000000e+00> : vector<2x4096xf32>
    %17 = tpu.matmul %15, %16, %cst_14 {dimension_numbers = #tpu.dot_dimension_numbers<[1], [0], [0], [1], [0, 0, 1, 1], [], []>} : vector<2x4xf32>, vector<4x4096xf32>, vector<2x4096xf32> -> vector<2x4096xf32>
    %c0_15 = arith.constant 0 : index
    %c0_16 = arith.constant 0 : index
    %18 = vector.load %arg7[%c0_15, %c0_16] : memref<1x4096xf32, #tpu.memory_space<vmem>>, vector<1x4096xf32>
    %19 = vector.broadcast %18 : vector<1x4096xf32> to vector<2x4096xf32>
    %20 = arith.addf %17, %19 : vector<2x4096xf32>
    %cst_17 = arith.constant 5.000000e-01 : f32
    %21 = vector.broadcast %cst_17 : f32 to vector<2x4096xf32>
    %22 = arith.mulf %21, %20 : vector<2x4096xf32>
    %23 = math.tanh %22 : vector<2x4096xf32>
    %cst_18 = arith.constant 1.000000e+00 : f32
    %24 = vector.broadcast %cst_18 : f32 to vector<2x4096xf32>
    %25 = arith.addf %23, %24 : vector<2x4096xf32>
    %cst_19 = arith.constant 5.000000e-01 : f32
    %26 = vector.broadcast %cst_19 : f32 to vector<2x4096xf32>
    %27 = arith.mulf %26, %25 : vector<2x4096xf32>
    %28 = arith.truncf %27 : vector<2x4096xf32> to vector<2x4096xbf16>
    %c0_20 = arith.constant 0 : index
    %c0_21 = arith.constant 0 : index
    %29 = vector.load %arg8[%c0_20, %c0_21] : memref<2x4096xbf16, #tpu.memory_space<vmem>>, vector<2x4096xbf16>
    tpu.vector_store %arg8[%c0_20, %c0_21], %28 {strides = array<i32>} : memref<2x4096xbf16, #tpu.memory_space<vmem>>, vector<2x4096xbf16>,
    return
  }
  func.func @transform_0(%arg0: i32) -> (i32, i32) {
    %c0_i32 = arith.constant 0 : i32
    %c0_i32_0 = arith.constant 0 : i32
    return %arg0, %c0_i32 : i32, i32
  }
  func.func @transform_1(%arg0: i32) -> (i32, i32) {
    %c0_i32 = arith.constant 0 : i32
    %c0_i32_0 = arith.constant 0 : i32
    %c0_i32_1 = arith.constant 0 : i32
    return %c0_i32, %c0_i32_0 : i32, i32
  }
  func.func @transform_2(%arg0: i32) -> (i32, i32) {
    %c0_i32 = arith.constant 0 : i32
    %c0_i32_0 = arith.constant 0 : i32
    %c0_i32_1 = arith.constant 0 : i32
    return %c0_i32, %c0_i32_0 : i32, i32
  }
  func.func @transform_3(%arg0: i32) -> (i32, i32) {
    %c0_i32 = arith.constant 0 : i32
    %c0_i32_0 = arith.constant 0 : i32
    %c0_i32_1 = arith.constant 0 : i32
    return %c0_i32, %c0_i32_0 : i32, i32
  }
  func.func @transform_4(%arg0: i32) -> (i32, i32) {
    %c0_i32 = arith.constant 0 : i32
    %c0_i32_0 = arith.constant 0 : i32
    %c0_i32_1 = arith.constant 0 : i32
    return %c0_i32, %c0_i32_0 : i32, i32
  }
  func.func @transform_5(%arg0: i32) -> (i32, i32) {
    %c0_i32 = arith.constant 0 : i32
    %c0_i32_0 = arith.constant 0 : i32
    %c0_i32_1 = arith.constant 0 : i32
    return %c0_i32, %c0_i32_0 : i32, i32
  }
  func.func @transform_6(%arg0: i32) -> (i32, i32) {
    %c0_i32 = arith.constant 0 : i32
    %c0_i32_0 = arith.constant 0 : i32
    %c0_i32_1 = arith.constant 0 : i32
    return %c0_i32, %c0_i32_0 : i32, i32
  }
  func.func @transform_7(%arg0: i32) -> (i32, i32) {
    %c0_i32 = arith.constant 0 : i32
    %c0_i32_0 = arith.constant 0 : i32
    return %arg0, %c0_i32 : i32, i32
  }
}

</mosaic_0001>

<llo_original>
// kernel: solo_generator_forward.1
$region0: #{solo_generator_forward.1}
  #allocation0 [shape = 'u32[]', space=smem, size = 0x4, offset = 0x4, fixed_abs, tag = 'smem constant byte address 0x4 - core index']
  #allocation1 [shape = 'u32[72,128]{1,0:T(1,128)}', space=vmem, size = 0x9000, scoped, tag = 'internal scratch']
  %s0 = inlined_call_operand.vmem [shape: f32[2,4096], index: 0, kind: input, shape index: {}]
  %s1 = inlined_call_operand.vmem [shape: bf16[4,4096], index: 1, kind: input, shape index: {}]
  %s2 = inlined_call_operand.vmem [shape: f32[1,4], index: 2, kind: input, shape index: {}]
  %s3 = inlined_call_operand.vmem [shape: f32[4,4], index: 3, kind: input, shape index: {}]
  %s4 = inlined_call_operand.vmem [shape: f32[1,4], index: 4, kind: input, shape index: {}]
  %s5 = inlined_call_operand.vmem [shape: f32[4,4096], index: 5, kind: input, shape index: {}]
  %s6 = inlined_call_operand.vmem [shape: f32[1,4096], index: 6, kind: input, shape index: {}]
  %s7 = inlined_call_operand.vmem [shape: bf16[2,4096], index: 7, kind: output, shape index: {}]
  %s8 = sld [smem:[#allocation0]]
  $region38: #{solo_generator_forward.1} parent=0
    _
  %s10 = ssub.s32 1, %s8
  %s11 = scalar_select 0, %s10, %s8
  // Predicated region
  $region2: #{solo_generator_forward.1} parent=0 // pred_check
    _
  $region3: #{solo_generator_forward.1} parent=0 // pred_check_branch
    %13 = sbr.rel (0) target = $region5
  $region4: #{solo_generator_forward.1} parent=0 // pred_region
    %p14 = scmp.lt.s32.totalorder %s11, 0
    %s15 = scalar_select %p14, %s11, 0
    %s16 = smul.addr %s15, 32
    %s17 = smul.addr %s16, 2
    %s18 = scalar_lea.vmem %s0, %s17
  $region5: #{solo_generator_forward.1} parent=0 // pred_fallthru
    _
  // Predicated region
  $region6: #{solo_generator_forward.1} parent=0 // pred_check
    _
  $region7: #{solo_generator_forward.1} parent=0 // pred_check_branch
    %20 = sbr.rel (0) target = $region9
  $region8: #{solo_generator_forward.1} parent=0 // pred_region
    _
  $region9: #{solo_generator_forward.1} parent=0 // pred_fallthru
    _
  // Predicated region
  $region10: #{solo_generator_forward.1} parent=0 // pred_check
    _
  $region11: #{solo_generator_forward.1} parent=0 // pred_check_branch
    %22 = sbr.rel (0) target = $region13
  $region12: #{solo_generator_forward.1} parent=0 // pred_region
    _
  $region13: #{solo_generator_forward.1} parent=0 // pred_fallthru
    _
  // Predicated region
  $region14: #{solo_generator_forward.1} parent=0 // pred_check
    _
  $region15: #{solo_generator_forward.1} parent=0 // pred_check_branch
    %24 = sbr.rel (0) target = $region17
  $region16: #{solo_generator_forward.1} parent=0 // pred_region
    _
  $region17: #{solo_generator_forward.1} parent=0 // pred_fallthru
    _
  // Predicated region
  $region18: #{solo_generator_forward.1} parent=0 // pred_check
    _
  $region19: #{solo_generator_forward.1} parent=0 // pred_check_branch
    %26 = sbr.rel (0) target = $region21
  $region20: #{solo_generator_forward.1} parent=0 // pred_region
    _
  $region21: #{solo_generator_forward.1} parent=0 // pred_fallthru
    _
  // Predicated region
  $region22: #{solo_generator_forward.1} parent=0 // pred_check
    _
  $region23: #{solo_generator_forward.1} parent=0 // pred_check_branch
    %28 = sbr.rel (0) target = $region25
  $region24: #{solo_generator_forward.1} parent=0 // pred_region
    _
  $region25: #{solo_generator_forward.1} parent=0 // pred_fallthru
    _
  // Predicated region
  $region26: #{solo_generator_forward.1} parent=0 // pred_check
    _
  $region27: #{solo_generator_forward.1} parent=0 // pred_check_branch
    %30 = sbr.rel (0) target = $region29
  $region28: #{solo_generator_forward.1} parent=0 // pred_region
    _
  $region29: #{solo_generator_forward.1} parent=0 // pred_fallthru
    _
  %p31 = scmp.lt.s32.totalorder %s11, 0
  %s32 = scalar_select %p31, %s11, 0
  %s33 = smul.addr %s32, 32
  %s34 = smul.addr %s33, 2
  %s35 = scalar_lea.vmem %s0, %s34
  %p36 = scmp.lt.s32.totalorder %s11, 0
  %s37 = scalar_select %p36, %s11, 0
  %s38 = smul.addr %s37, 32
  %s39 = scalar_lea.vmem %s7, %s38
  %p40 = scmp.lt.s32.totalorder %s11, 0
  %s41 = scalar_select %p40, %s11, 0
  %s42 = smul.addr %s41, 32
  %s43 = smul.addr %s42, 2
  %s44 = scalar_lea.vmem %s0, %s43
  %p45 = scmp.lt.s32.totalorder %s11, 0
  %s46 = scalar_select %p45, %s11, 0
  %s47 = smul.addr %s46, 32
  %s48 = scalar_lea.vmem %s7, %s47
  %v50 = vld [vmem:[%s44] sm:$0xff]
  %v51 = vld [vmem:[%s44 + $0x8] sm:$0xff]
  %v52 = vld [vmem:[%s44 + $0x10] sm:$0xff]
  %v53 = vld [vmem:[%s44 + $0x18] sm:$0xff]
  %v54 = vld [vmem:[%s44 + $0x20] sm:$0xff]
  %v55 = vld [vmem:[%s44 + $0x28] sm:$0xff]
  %v56 = vld [vmem:[%s44 + $0x30] sm:$0xff]
  %v57 = vld [vmem:[%s44 + $0x38] sm:$0xff]
  %66 = vst [vmem:[#allocation1] ss:$4 sm:$0xff] %v50
  %s67 = scalar_lea.vmem [#allocation1], 32
  %68 = vst [vmem:[%s67] ss:$4 sm:$0xff] %v51
  %v69 = vld.sshfl [vmem:[#allocation1] sm:$0xff pattern:$0x73625140]
  %v70 = vld.sshfl [vmem:[#allocation1 + $0x8] sm:$0xff pattern:$0x73625140]
  %v71 = vld.sshfl [vmem:[#allocation1 + $0x10] sm:$0xff pattern:$0x73625140]
  %v72 = vld.sshfl [vmem:[#allocation1 + $0x18] sm:$0xff pattern:$0x73625140]
  %v73 = vld.sshfl [vmem:[#allocation1 + $0x20] sm:$0xff pattern:$0x73625140]
  %v74 = vld.sshfl [vmem:[#allocation1 + $0x28] sm:$0xff pattern:$0x73625140]
  %v75 = vld.sshfl [vmem:[#allocation1 + $0x30] sm:$0xff pattern:$0x73625140]
  %v76 = vld.sshfl [vmem:[#allocation1 + $0x38] sm:$0xff pattern:$0x73625140]
  %77 = vst [vmem:[#allocation1] ss:$4 sm:$0xff] %v52
  %78 = vst [vmem:[%s67] ss:$4 sm:$0xff] %v53
  %v79 = vld.sshfl [vmem:[#allocation1] sm:$0xff pattern:$0x73625140]
  %v80 = vld.sshfl [vmem:[#allocation1 + $0x8] sm:$0xff pattern:$0x73625140]
  %v81 = vld.sshfl [vmem:[#allocation1 + $0x10] sm:$0xff pattern:$0x73625140]
  %v82 = vld.sshfl [vmem:[#allocation1 + $0x18] sm:$0xff pattern:$0x73625140]
  %v83 = vld.sshfl [vmem:[#allocation1 + $0x20] sm:$0xff pattern:$0x73625140]
  %v84 = vld.sshfl [vmem:[#allocation1 + $0x28] sm:$0xff pattern:$0x73625140]
  %v85 = vld.sshfl [vmem:[#allocation1 + $0x30] sm:$0xff pattern:$0x73625140]
  %v86 = vld.sshfl [vmem:[#allocation1 + $0x38] sm:$0xff pattern:$0x73625140]
  %87 = vst [vmem:[#allocation1] ss:$4 sm:$0xff] %v54
  %88 = vst [vmem:[%s67] ss:$4 sm:$0xff] %v55
  %v89 = vld.sshfl [vmem:[#allocation1] sm:$0xff pattern:$0x73625140]
  %v90 = vld.sshfl [vmem:[#allocation1 + $0x8] sm:$0xff pattern:$0x73625140]
  %v91 = vld.sshfl [vmem:[#allocation1 + $0x10] sm:$0xff pattern:$0x73625140]
  %v92 = vld.sshfl [vmem:[#allocation1 + $0x18] sm:$0xff pattern:$0x73625140]
  %v93 = vld.sshfl [vmem:[#allocation1 + $0x20] sm:$0xff pattern:$0x73625140]
  %v94 = vld.sshfl [vmem:[#allocation1 + $0x28] sm:$0xff pattern:$0x73625140]
  %v95 = vld.sshfl [vmem:[#allocation1 + $0x30] sm:$0xff pattern:$0x73625140]
  %v96 = vld.sshfl [vmem:[#allocation1 + $0x38] sm:$0xff pattern:$0x73625140]
  %97 = vst [vmem:[#allocation1] ss:$4 sm:$0xff] %v56
  %98 = vst [vmem:[%s67] ss:$4 sm:$0xff] %v57
  %v99 = vld.sshfl [vmem:[#allocation1] sm:$0xff pattern:$0x73625140]
  %v100 = vld.sshfl [vmem:[#allocation1 + $0x8] sm:$0xff pattern:$0x73625140]
  %v101 = vld.sshfl [vmem:[#allocation1 + $0x10] sm:$0xff pattern:$0x73625140]
  %v102 = vld.sshfl [vmem:[#allocation1 + $0x18] sm:$0xff pattern:$0x73625140]
  %v103 = vld.sshfl [vmem:[#allocation1 + $0x20] sm:$0xff pattern:$0x73625140]
  %v104 = vld.sshfl [vmem:[#allocation1 + $0x28] sm:$0xff pattern:$0x73625140]
  %v105 = vld.sshfl [vmem:[#allocation1 + $0x30] sm:$0xff pattern:$0x73625140]
  %v106 = vld.sshfl [vmem:[#allocation1 + $0x38] sm:$0xff pattern:$0x73625140]
  %v139 = vpack.c.bf16 %v69, %v69
  %v140 = vpack.c.bf16 %v70, %v70
  %v141 = vpack.c.bf16 %v71, %v71
  %v142 = vpack.c.bf16 %v72, %v72
  %v143 = vpack.c.bf16 %v73, %v73
  %v144 = vpack.c.bf16 %v74, %v74
  %v145 = vpack.c.bf16 %v75, %v75
  %v146 = vpack.c.bf16 %v76, %v76
  %v147 = vpack.c.bf16 %v79, %v79
  %v148 = vpack.c.bf16 %v80, %v80
  %v149 = vpack.c.bf16 %v81, %v81
  %v150 = vpack.c.bf16 %v82, %v82
  %v151 = vpack.c.bf16 %v83, %v83
  %v152 = vpack.c.bf16 %v84, %v84
  %v153 = vpack.c.bf16 %v85, %v85
  %v154 = vpack.c.bf16 %v86, %v86
  %v155 = vpack.c.bf16 %v89, %v89
  %v156 = vpack.c.bf16 %v90, %v90
  %v157 = vpack.c.bf16 %v91, %v91
  %v158 = vpack.c.bf16 %v92, %v92
  %v159 = vpack.c.bf16 %v93, %v93
  %v160 = vpack.c.bf16 %v94, %v94
  %v161 = vpack.c.bf16 %v95, %v95
  %v162 = vpack.c.bf16 %v96, %v96
  %v163 = vpack.c.bf16 %v99, %v99
  %v164 = vpack.c.bf16 %v100, %v100
  %v165 = vpack.c.bf16 %v101, %v101
  %v166 = vpack.c.bf16 %v102, %v102
  %v167 = vpack.c.bf16 %v103, %v103
  %v168 = vpack.c.bf16 %v104, %v104
  %v169 = vpack.c.bf16 %v105, %v105
  %v170 = vpack.c.bf16 %v106, %v106
  %v171 = vld [vmem:[%s1] sm:$0xff]
  %v172 = vld [vmem:[%s1 + $0x8] sm:$0xff]
  %v173 = vld [vmem:[%s1 + $0x10] sm:$0xff]
  %v174 = vld [vmem:[%s1 + $0x18] sm:$0xff]
  %v175 = vld [vmem:[%s1 + $0x20] sm:$0xff]
  %v176 = vld [vmem:[%s1 + $0x28] sm:$0xff]
  %v177 = vld [vmem:[%s1 + $0x30] sm:$0xff]
  %v178 = vld [vmem:[%s1 + $0x38] sm:$0xff]
  %v179 = vld [vmem:[%s2] sm:$0x1]
  %v181 = vperm.slane %v179, 0
  %184 = vst [vmem:[#allocation1] ss:$4 sm:$0xff] %v171
  %s186 = scalar_lea.vmem [#allocation1], 32
  %187 = vst [vmem:[%s186] ss:$4 sm:$0xff] %v172
  %v188 = vld.sshfl [vmem:[#allocation1] sm:$0xff pattern:$0x73625140]
  %v189 = vld.sshfl [vmem:[#allocation1 + $0x8] sm:$0xff pattern:$0x73625140]
  %v190 = vld.sshfl [vmem:[#allocation1 + $0x10] sm:$0xff pattern:$0x73625140]
  %v191 = vld.sshfl [vmem:[#allocation1 + $0x18] sm:$0xff pattern:$0x73625140]
  %v192 = vld.sshfl [vmem:[#allocation1 + $0x20] sm:$0xff pattern:$0x73625140]
  %v193 = vld.sshfl [vmem:[#allocation1 + $0x28] sm:$0xff pattern:$0x73625140]
  %v194 = vld.sshfl [vmem:[#allocation1 + $0x30] sm:$0xff pattern:$0x73625140]
  %v195 = vld.sshfl [vmem:[#allocation1 + $0x38] sm:$0xff pattern:$0x73625140]
  %197 = vst [vmem:[#allocation1] ss:$4 sm:$0xff] %v173
  %199 = vst [vmem:[%s186] ss:$4 sm:$0xff] %v174
  %v200 = vld.sshfl [vmem:[#allocation1] sm:$0xff pattern:$0x73625140]
  %v201 = vld.sshfl [vmem:[#allocation1 + $0x8] sm:$0xff pattern:$0x73625140]
  %v202 = vld.sshfl [vmem:[#allocation1 + $0x10] sm:$0xff pattern:$0x73625140]
  %v203 = vld.sshfl [vmem:[#allocation1 + $0x18] sm:$0xff pattern:$0x73625140]
  %v204 = vld.sshfl [vmem:[#allocation1 + $0x20] sm:$0xff pattern:$0x73625140]
  %v205 = vld.sshfl [vmem:[#allocation1 + $0x28] sm:$0xff pattern:$0x73625140]
  %v206 = vld.sshfl [vmem:[#allocation1 + $0x30] sm:$0xff pattern:$0x73625140]
  %v207 = vld.sshfl [vmem:[#allocation1 + $0x38] sm:$0xff pattern:$0x73625140]
  %209 = vst [vmem:[#allocation1] ss:$4 sm:$0xff] %v175
  %211 = vst [vmem:[%s186] ss:$4 sm:$0xff] %v176
  %v212 = vld.sshfl [vmem:[#allocation1] sm:$0xff pattern:$0x73625140]
  %v213 = vld.sshfl [vmem:[#allocation1 + $0x8] sm:$0xff pattern:$0x73625140]
  %v214 = vld.sshfl [vmem:[#allocation1 + $0x10] sm:$0xff pattern:$0x73625140]
  %v215 = vld.sshfl [vmem:[#allocation1 + $0x18] sm:$0xff pattern:$0x73625140]
  %v216 = vld.sshfl [vmem:[#allocation1 + $0x20] sm:$0xff pattern:$0x73625140]
  %v217 = vld.sshfl [vmem:[#allocation1 + $0x28] sm:$0xff pattern:$0x73625140]
  %v218 = vld.sshfl [vmem:[#allocation1 + $0x30] sm:$0xff pattern:$0x73625140]
  %v219 = vld.sshfl [vmem:[#allocation1 + $0x38] sm:$0xff pattern:$0x73625140]
  %221 = vst [vmem:[#allocation1] ss:$4 sm:$0xff] %v177
  %223 = vst [vmem:[%s186] ss:$4 sm:$0xff] %v178
  %v224 = vld.sshfl [vmem:[#allocation1] sm:$0xff pattern:$0x73625140]
  %v225 = vld.sshfl [vmem:[#allocation1 + $0x8] sm:$0xff pattern:$0x73625140]
  %v226 = vld.sshfl [vmem:[#allocation1 + $0x10] sm:$0xff pattern:$0x73625140]
  %v227 = vld.sshfl [vmem:[#allocation1 + $0x18] sm:$0xff pattern:$0x73625140]
  %v228 = vld.sshfl [vmem:[#allocation1 + $0x20] sm:$0xff pattern:$0x73625140]
  %v229 = vld.sshfl [vmem:[#allocation1 + $0x28] sm:$0xff pattern:$0x73625140]
  %v230 = vld.sshfl [vmem:[#allocation1 + $0x30] sm:$0xff pattern:$0x73625140]
  %v231 = vld.sshfl [vmem:[#allocation1 + $0x38] sm:$0xff pattern:$0x73625140]
  %264 = vmatpush.bf16.xpose.msra.mxu0 0
  %265 = vmatpush.bf16.xpose.msra.mxu0 0
  %266 = vmatpush.bf16.xpose.msra.mxu0 0
  %267 = vmatpush.bf16.xpose.msra.mxu0 0
  %268 = vmatpush.bf16.xpose.msra.mxu0 0
  %269 = vmatpush.bf16.xpose.msra.mxu0 0
  %270 = vmatpush.bf16.xpose.msra.mxu0 0
  %271 = vmatpush.bf16.xpose.msra.mxu0 %v188
  %272 = vmatmul.bf16.gmra.mxu0 %v139
  %v273 = vpop.f32.mrf.mxu0
  %v274 = vadd.f32 %v181, %v273
  %v275 = vpop.f32.mrf.mxu0
  %276 = vdwg.mxu0
  %277 = vmatpush.bf16.xpose.msra.mxu0 0
  %278 = vmatpush.bf16.xpose.msra.mxu0 0
  %279 = vmatpush.bf16.xpose.msra.mxu0 0
  %280 = vmatpush.bf16.xpose.msra.mxu0 0
  %281 = vmatpush.bf16.xpose.msra.mxu0 0
  %282 = vmatpush.bf16.xpose.msra.mxu0 0
  %283 = vmatpush.bf16.xpose.msra.mxu0 0
  %284 = vmatpush.bf16.xpose.msra.mxu0 %v189
  %285 = vmatmul.bf16.gmra.mxu0 %v140
  %v286 = vpop.f32.mrf.mxu0
  %v287 = vadd.f32 %v274, %v286
  %v288 = vpop.f32.mrf.mxu0
  %289 = vdwg.mxu0
  %290 = vmatpush.bf16.xpose.msra.mxu0 0
  %291 = vmatpush.bf16.xpose.msra.mxu0 0
  %292 = vmatpush.bf16.xpose.msra.mxu0 0
  %293 = vmatpush.bf16.xpose.msra.mxu0 0
  %294 = vmatpush.bf16.xpose.msra.mxu0 0
  %295 = vmatpush.bf16.xpose.msra.mxu0 0
  %296 = vmatpush.bf16.xpose.msra.mxu0 0
  %297 = vmatpush.bf16.xpose.msra.mxu0 %v190
  %298 = vmatmul.bf16.gmra.mxu0 %v141
  %v299 = vpop.f32.mrf.mxu0
  %v300 = vadd.f32 %v287, %v299
  %v301 = vpop.f32.mrf.mxu0
  %302 = vdwg.mxu0
  %303 = vmatpush.bf16.xpose.msra.mxu0 0
  %304 = vmatpush.bf16.xpose.msra.mxu0 0
  %305 = vmatpush.bf16.xpose.msra.mxu0 0
  %306 = vmatpush.bf16.xpose.msra.mxu0 0
  %307 = vmatpush.bf16.xpose.msra.mxu0 0
  %308 = vmatpush.bf16.xpose.msra.mxu0 0
  %309 = vmatpush.bf16.xpose.msra.mxu0 0
  %310 = vmatpush.bf16.xpose.msra.mxu0 %v191
  %311 = vmatmul.bf16.gmra.mxu0 %v142
  %v312 = vpop.f32.mrf.mxu0
  %v313 = vadd.f32 %v300, %v312
  %v314 = vpop.f32.mrf.mxu0
  %315 = vdwg.mxu0
  %316 = vmatpush.bf16.xpose.msra.mxu0 0
  %317 = vmatpush.bf16.xpose.msra.mxu0 0
  %318 = vmatpush.bf16.xpose.msra.mxu0 0
  %319 = vmatpush.bf16.xpose.msra.mxu0 0
  %320 = vmatpush.bf16.xpose.msra.mxu0 0
  %321 = vmatpush.bf16.xpose.msra.mxu0 0
  %322 = vmatpush.bf16.xpose.msra.mxu0 0
  %323 = vmatpush.bf16.xpose.msra.mxu0 %v192
  %324 = vmatmul.bf16.gmra.mxu0 %v143
  %v325 = vpop.f32.mrf.mxu0
  %v326 = vadd.f32 %v313, %v325
  %v327 = vpop.f32.mrf.mxu0
  %328 = vdwg.mxu0
  %329 = vmatpush.bf16.xpose.msra.mxu0 0
  %330 = vmatpush.bf16.xpose.msra.mxu0 0
  %331 = vmatpush.bf16.xpose.msra.mxu0 0
  %332 = vmatpush.bf16.xpose.msra.mxu0 0
  %333 = vmatpush.bf16.xpose.msra.mxu0 0
  %334 = vmatpush.bf16.xpose.msra.mxu0 0
  %335 = vmatpush.bf16.xpose.msra.mxu0 0
  %336 = vmatpush.bf16.xpose.msra.mxu0 %v193
  %337 = vmatmul.bf16.gmra.mxu0 %v144
  %v338 = vpop.f32.mrf.mxu0
  %v339 = vadd.f32 %v326, %v338
  %v340 = vpop.f32.mrf.mxu0
  %341 = vdwg.mxu0
  %342 = vmatpush.bf16.xpose.msra.mxu0 0
  %343 = vmatpush.bf16.xpose.msra.mxu0 0
  %344 = vmatpush.bf16.xpose.msra.mxu0 0
  %345 = vmatpush.bf16.xpose.msra.mxu0 0
  %346 = vmatpush.bf16.xpose.msra.mxu0 0
  %347 = vmatpush.bf16.xpose.msra.mxu0 0
  %348 = vmatpush.bf16.xpose.msra.mxu0 0
  %349 = vmatpush.bf16.xpose.msra.mxu0 %v194
  %350 = vmatmul.bf16.gmra.mxu0 %v145
  %v351 = vpop.f32.mrf.mxu0
  %v352 = vadd.f32 %v339, %v351
  %v353 = vpop.f32.mrf.mxu0
  %354 = vdwg.mxu0
  %355 = vmatpush.bf16.xpose.msra.mxu0 0
  %356 = vmatpush.bf16.xpose.msra.mxu0 0
  %357 = vmatpush.bf16.xpose.msra.mxu0 0
  %358 = vmatpush.bf16.xpose.msra.mxu0 0
  %359 = vmatpush.bf16.xpose.msra.mxu0 0
  %360 = vmatpush.bf16.xpose.msra.mxu0 0
  %361 = vmatpush.bf16.xpose.msra.mxu0 0
  %362 = vmatpush.bf16.xpose.msra.mxu0 %v195
  %363 = vmatmul.bf16.gmra.mxu0 %v146
  %v364 = vpop.f32.mrf.mxu0
  %v365 = vadd.f32 %v352, %v364
  %v366 = vpop.f32.mrf.mxu0
  %367 = vdwg.mxu0
  %368 = vmatpush.bf16.xpose.msra.mxu0 0
  %369 = vmatpush.bf16.xpose.msra.mxu0 0
  %370 = vmatpush.bf16.xpose.msra.mxu0 0
  %371 = vmatpush.bf16.xpose.msra.mxu0 0
  %372 = vmatpush.bf16.xpose.msra.mxu0 0
  %373 = vmatpush.bf16.xpose.msra.mxu0 0
  %374 = vmatpush.bf16.xpose.msra.mxu0 0
  %375 = vmatpush.bf16.xpose.msra.mxu0 %v200
  %376 = vmatmul.bf16.gmra.mxu0 %v147
  %v377 = vpop.f32.mrf.mxu0
  %v378 = vadd.f32 %v365, %v377
  %v379 = vpop.f32.mrf.mxu0
  %380 = vdwg.mxu0
  %381 = vmatpush.bf16.xpose.msra.mxu0 0
  %382 = vmatpush.bf16.xpose.msra.mxu0 0
  %383 = vmatpush.bf16.xpose.msra.mxu0 0
  %384 = vmatpush.bf16.xpose.msra.mxu0 0
  %385 = vmatpush.bf16.xpose.msra.mxu0 0
  %386 = vmatpush.bf16.xpose.msra.mxu0 0
  %387 = vmatpush.bf16.xpose.msra.mxu0 0
  %388 = vmatpush.bf16.xpose.msra.mxu0 %v201
  %389 = vmatmul.bf16.gmra.mxu0 %v148
  %v390 = vpop.f32.mrf.mxu0
  %v391 = vadd.f32 %v378, %v390
  %v392 = vpop.f32.mrf.mxu0
  %393 = vdwg.mxu0
  %394 = vmatpush.bf16.xpose.msra.mxu0 0
  %395 = vmatpush.bf16.xpose.msra.mxu0 0
  %396 = vmatpush.bf16.xpose.msra.mxu0 0
  %397 = vmatpush.bf16.xpose.msra.mxu0 0
  %398 = vmatpush.bf16.xpose.msra.mxu0 0
  %399 = vmatpush.bf16.xpose.msra.mxu0 0
  %400 = vmatpush.bf16.xpose.msra.mxu0 0
  %401 = vmatpush.bf16.xpose.msra.mxu0 %v202
  %402 = vmatmul.bf16.gmra.mxu0 %v149
  %v403 = vpop.f32.mrf.mxu0
  %v404 = vadd.f32 %v391, %v403
  %v405 = vpop.f32.mrf.mxu0
  %406 = vdwg.mxu0
  %407 = vmatpush.bf16.xpose.msra.mxu0 0
  %408 = vmatpush.bf16.xpose.msra.mxu0 0
  %409 = vmatpush.bf16.xpose.msra.mxu0 0
  %410 = vmatpush.bf16.xpose.msra.mxu0 0
  %411 = vmatpush.bf16.xpose.msra.mxu0 0
  %412 = vmatpush.bf16.xpose.msra.mxu0 0
  %413 = vmatpush.bf16.xpose.msra.mxu0 0
  %414 = vmatpush.bf16.xpose.msra.mxu0 %v203
  %415 = vmatmul.bf16.gmra.mxu0 %v150
  %v416 = vpop.f32.mrf.mxu0
  %v417 = vadd.f32 %v404, %v416
  %v418 = vpop.f32.mrf.mxu0
  %419 = vdwg.mxu0
  %420 = vmatpush.bf16.xpose.msra.mxu0 0
  %421 = vmatpush.bf16.xpose.msra.mxu0 0
  %422 = vmatpush.bf16.xpose.msra.mxu0 0
  %423 = vmatpush.bf16.xpose.msra.mxu0 0
  %424 = vmatpush.bf16.xpose.msra.mxu0 0
  %425 = vmatpush.bf16.xpose.msra.mxu0 0
  %426 = vmatpush.bf16.xpose.msra.mxu0 0
  %427 = vmatpush.bf16.xpose.msra.mxu0 %v204
  %428 = vmatmul.bf16.gmra.mxu0 %v151
  %v429 = vpop.f32.mrf.mxu0
  %v430 = vadd.f32 %v417, %v429
  %v431 = vpop.f32.mrf.mxu0
  %432 = vdwg.mxu0
  %433 = vmatpush.bf16.xpose.msra.mxu0 0
  %434 = vmatpush.bf16.xpose.msra.mxu0 0
  %435 = vmatpush.bf16.xpose.msra.mxu0 0
  %436 = vmatpush.bf16.xpose.msra.mxu0 0
  %437 = vmatpush.bf16.xpose.msra.mxu0 0
  %438 = vmatpush.bf16.xpose.msra.mxu0 0
  %439 = vmatpush.bf16.xpose.msra.mxu0 0
  %440 = vmatpush.bf16.xpose.msra.mxu0 %v205
  %441 = vmatmul.bf16.gmra.mxu0 %v152
  %v442 = vpop.f32.mrf.mxu0
  %v443 = vadd.f32 %v430, %v442
  %v444 = vpop.f32.mrf.mxu0
  %445 = vdwg.mxu0
  %446 = vmatpush.bf16.xpose.msra.mxu0 0
  %447 = vmatpush.bf16.xpose.msra.mxu0 0
  %448 = vmatpush.bf16.xpose.msra.mxu0 0
  %449 = vmatpush.bf16.xpose.msra.mxu0 0
  %450 = vmatpush.bf16.xpose.msra.mxu0 0
  %451 = vmatpush.bf16.xpose.msra.mxu0 0
  %452 = vmatpush.bf16.xpose.msra.mxu0 0
  %453 = vmatpush.bf16.xpose.msra.mxu0 %v206
  %454 = vmatmul.bf16.gmra.mxu0 %v153
  %v455 = vpop.f32.mrf.mxu0
  %v456 = vadd.f32 %v443, %v455
  %v457 = vpop.f32.mrf.mxu0
  %458 = vdwg.mxu0
  %459 = vmatpush.bf16.xpose.msra.mxu0 0
  %460 = vmatpush.bf16.xpose.msra.mxu0 0
  %461 = vmatpush.bf16.xpose.msra.mxu0 0
  %462 = vmatpush.bf16.xpose.msra.mxu0 0
  %463 = vmatpush.bf16.xpose.msra.mxu0 0
  %464 = vmatpush.bf16.xpose.msra.mxu0 0
  %465 = vmatpush.bf16.xpose.msra.mxu0 0
  %466 = vmatpush.bf16.xpose.msra.mxu0 %v207
  %467 = vmatmul.bf16.gmra.mxu0 %v154
  %v468 = vpop.f32.mrf.mxu0
  %v469 = vadd.f32 %v456, %v468
  %v470 = vpop.f32.mrf.mxu0
  %471 = vdwg.mxu0
  %472 = vmatpush.bf16.xpose.msra.mxu0 0
  %473 = vmatpush.bf16.xpose.msra.mxu0 0
  %474 = vmatpush.bf16.xpose.msra.mxu0 0
  %475 = vmatpush.bf16.xpose.msra.mxu0 0
  %476 = vmatpush.bf16.xpose.msra.mxu0 0
  %477 = vmatpush.bf16.xpose.msra.mxu0 0
  %478 = vmatpush.bf16.xpose.msra.mxu0 0
  %479 = vmatpush.bf16.xpose.msra.mxu0 %v212
  %480 = vmatmul.bf16.gmra.mxu0 %v155
  %v481 = vpop.f32.mrf.mxu0
  %v482 = vadd.f32 %v469, %v481
  %v483 = vpop.f32.mrf.mxu0
  %484 = vdwg.mxu0
  %485 = vmatpush.bf16.xpose.msra.mxu0 0
  %486 = vmatpush.bf16.xpose.msra.mxu0 0
  %487 = vmatpush.bf16.xpose.msra.mxu0 0
  %488 = vmatpush.bf16.xpose.msra.mxu0 0
  %489 = vmatpush.bf16.xpose.msra.mxu0 0
  %490 = vmatpush.bf16.xpose.msra.mxu0 0
  %491 = vmatpush.bf16.xpose.msra.mxu0 0
  %492 = vmatpush.bf16.xpose.msra.mxu0 %v213
  %493 = vmatmul.bf16.gmra.mxu0 %v156
  %v494 = vpop.f32.mrf.mxu0
  %v495 = vadd.f32 %v482, %v494
  %v496 = vpop.f32.mrf.mxu0
  %497 = vdwg.mxu0
  %498 = vmatpush.bf16.xpose.msra.mxu0 0
  %499 = vmatpush.bf16.xpose.msra.mxu0 0
  %500 = vmatpush.bf16.xpose.msra.mxu0 0
  %501 = vmatpush.bf16.xpose.msra.mxu0 0
  %502 = vmatpush.bf16.xpose.msra.mxu0 0
  %503 = vmatpush.bf16.xpose.msra.mxu0 0
  %504 = vmatpush.bf16.xpose.msra.mxu0 0
  %505 = vmatpush.bf16.xpose.msra.mxu0 %v214
  %506 = vmatmul.bf16.gmra.mxu0 %v157
  %v507 = vpop.f32.mrf.mxu0
  %v508 = vadd.f32 %v495, %v507
  %v509 = vpop.f32.mrf.mxu0
  %510 = vdwg.mxu0
  %511 = vmatpush.bf16.xpose.msra.mxu0 0
  %512 = vmatpush.bf16.xpose.msra.mxu0 0
  %513 = vmatpush.bf16.xpose.msra.mxu0 0
  %514 = vmatpush.bf16.xpose.msra.mxu0 0
  %515 = vmatpush.bf16.xpose.msra.mxu0 0
  %516 = vmatpush.bf16.xpose.msra.mxu0 0
  %517 = vmatpush.bf16.xpose.msra.mxu0 0
  %518 = vmatpush.bf16.xpose.msra.mxu0 %v215
  %519 = vmatmul.bf16.gmra.mxu0 %v158
  %v520 = vpop.f32.mrf.mxu0
  %v521 = vadd.f32 %v508, %v520
  %v522 = vpop.f32.mrf.mxu0
  %523 = vdwg.mxu0
  %524 = vmatpush.bf16.xpose.msra.mxu0 0
  %525 = vmatpush.bf16.xpose.msra.mxu0 0
  %526 = vmatpush.bf16.xpose.msra.mxu0 0
  %527 = vmatpush.bf16.xpose.msra.mxu0 0
  %528 = vmatpush.bf16.xpose.msra.mxu0 0
  %529 = vmatpush.bf16.xpose.msra.mxu0 0
  %530 = vmatpush.bf16.xpose.msra.mxu0 0
  %531 = vmatpush.bf16.xpose.msra.mxu0 %v216
  %532 = vmatmul.bf16.gmra.mxu0 %v159
  %v533 = vpop.f32.mrf.mxu0
  %v534 = vadd.f32 %v521, %v533
  %v535 = vpop.f32.mrf.mxu0
  %536 = vdwg.mxu0
  %537 = vmatpush.bf16.xpose.msra.mxu0 0
  %538 = vmatpush.bf16.xpose.msra.mxu0 0
  %539 = vmatpush.bf16.xpose.msra.mxu0 0
  %540 = vmatpush.bf16.xpose.msra.mxu0 0
  %541 = vmatpush.bf16.xpose.msra.mxu0 0
  %542 = vmatpush.bf16.xpose.msra.mxu0 0
  %543 = vmatpush.bf16.xpose.msra.mxu0 0
  %544 = vmatpush.bf16.xpose.msra.mxu0 %v217
  %545 = vmatmul.bf16.gmra.mxu0 %v160
  %v546 = vpop.f32.mrf.mxu0
  %v547 = vadd.f32 %v534, %v546
  %v548 = vpop.f32.mrf.mxu0
  %549 = vdwg.mxu0
  %550 = vmatpush.bf16.xpose.msra.mxu0 0
  %551 = vmatpush.bf16.xpose.msra.mxu0 0
  %552 = vmatpush.bf16.xpose.msra.mxu0 0
  %553 = vmatpush.bf16.xpose.msra.mxu0 0
  %554 = vmatpush.bf16.xpose.msra.mxu0 0
  %555 = vmatpush.bf16.xpose.msra.mxu0 0
  %556 = vmatpush.bf16.xpose.msra.mxu0 0
  %557 = vmatpush.bf16.xpose.msra.mxu0 %v218
  %558 = vmatmul.bf16.gmra.mxu0 %v161
  %v559 = vpop.f32.mrf.mxu0
  %v560 = vadd.f32 %v547, %v559
  %v561 = vpop.f32.mrf.mxu0
  %562 = vdwg.mxu0
  %563 = vmatpush.bf16.xpose.msra.mxu0 0
  %564 = vmatpush.bf16.xpose.msra.mxu0 0
  %565 = vmatpush.bf16.xpose.msra.mxu0 0
  %566 = vmatpush.bf16.xpose.msra.mxu0 0
  %567 = vmatpush.bf16.xpose.msra.mxu0 0
  %568 = vmatpush.bf16.xpose.msra.mxu0 0
  %569 = vmatpush.bf16.xpose.msra.mxu0 0
  %570 = vmatpush.bf16.xpose.msra.mxu0 %v219
  %571 = vmatmul.bf16.gmra.mxu0 %v162
  %v572 = vpop.f32.mrf.mxu0
  %v573 = vadd.f32 %v560, %v572
  %v574 = vpop.f32.mrf.mxu0
  %575 = vdwg.mxu0
  %576 = vmatpush.bf16.xpose.msra.mxu0 0
  %577 = vmatpush.bf16.xpose.msra.mxu0 0
  %578 = vmatpush.bf16.xpose.msra.mxu0 0
  %579 = vmatpush.bf16.xpose.msra.mxu0 0
  %580 = vmatpush.bf16.xpose.msra.mxu0 0
  %581 = vmatpush.bf16.xpose.msra.mxu0 0
  %582 = vmatpush.bf16.xpose.msra.mxu0 0
  %583 = vmatpush.bf16.xpose.msra.mxu0 %v224
  %584 = vmatmul.bf16.gmra.mxu0 %v163
  %v585 = vpop.f32.mrf.mxu0
  %v586 = vadd.f32 %v573, %v585
  %v587 = vpop.f32.mrf.mxu0
  %588 = vdwg.mxu0
  %589 = vmatpush.bf16.xpose.msra.mxu0 0
  %590 = vmatpush.bf16.xpose.msra.mxu0 0
  %591 = vmatpush.bf16.xpose.msra.mxu0 0
  %592 = vmatpush.bf16.xpose.msra.mxu0 0
  %593 = vmatpush.bf16.xpose.msra.mxu0 0
  %594 = vmatpush.bf16.xpose.msra.mxu0 0
  %595 = vmatpush.bf16.xpose.msra.mxu0 0
  %596 = vmatpush.bf16.xpose.msra.mxu0 %v225
  %597 = vmatmul.bf16.gmra.mxu0 %v164
  %v598 = vpop.f32.mrf.mxu0
  %v599 = vadd.f32 %v586, %v598
  %v600 = vpop.f32.mrf.mxu0
  %601 = vdwg.mxu0
  %602 = vmatpush.bf16.xpose.msra.mxu0 0
  %603 = vmatpush.bf16.xpose.msra.mxu0 0
  %604 = vmatpush.bf16.xpose.msra.mxu0 0
  %605 = vmatpush.bf16.xpose.msra.mxu0 0
  %606 = vmatpush.bf16.xpose.msra.mxu0 0
  %607 = vmatpush.bf16.xpose.msra.mxu0 0
  %608 = vmatpush.bf16.xpose.msra.mxu0 0
  %609 = vmatpush.bf16.xpose.msra.mxu0 %v226
  %610 = vmatmul.bf16.gmra.mxu0 %v165
  %v611 = vpop.f32.mrf.mxu0
  %v612 = vadd.f32 %v599, %v611
  %v613 = vpop.f32.mrf.mxu0
  %614 = vdwg.mxu0
  %615 = vmatpush.bf16.xpose.msra.mxu0 0
  %616 = vmatpush.bf16.xpose.msra.mxu0 0
  %617 = vmatpush.bf16.xpose.msra.mxu0 0
  %618 = vmatpush.bf16.xpose.msra.mxu0 0
  %619 = vmatpush.bf16.xpose.msra.mxu0 0
  %620 = vmatpush.bf16.xpose.msra.mxu0 0
  %621 = vmatpush.bf16.xpose.msra.mxu0 0
  %622 = vmatpush.bf16.xpose.msra.mxu0 %v227
  %623 = vmatmul.bf16.gmra.mxu0 %v166
  %v624 = vpop.f32.mrf.mxu0
  %v625 = vadd.f32 %v612, %v624
  %v626 = vpop.f32.mrf.mxu0
  %627 = vdwg.mxu0
  %628 = vmatpush.bf16.xpose.msra.mxu0 0
  %629 = vmatpush.bf16.xpose.msra.mxu0 0
  %630 = vmatpush.bf16.xpose.msra.mxu0 0
  %631 = vmatpush.bf16.xpose.msra.mxu0 0
  %632 = vmatpush.bf16.xpose.msra.mxu0 0
  %633 = vmatpush.bf16.xpose.msra.mxu0 0
  %634 = vmatpush.bf16.xpose.msra.mxu0 0
  %635 = vmatpush.bf16.xpose.msra.mxu0 %v228
  %636 = vmatmul.bf16.gmra.mxu0 %v167
  %v637 = vpop.f32.mrf.mxu0
  %v638 = vadd.f32 %v625, %v637
  %v639 = vpop.f32.mrf.mxu0
  %640 = vdwg.mxu0
  %641 = vmatpush.bf16.xpose.msra.mxu0 0
  %642 = vmatpush.bf16.xpose.msra.mxu0 0
  %643 = vmatpush.bf16.xpose.msra.mxu0 0
  %644 = vmatpush.bf16.xpose.msra.mxu0 0
  %645 = vmatpush.bf16.xpose.msra.mxu0 0
  %646 = vmatpush.bf16.xpose.msra.mxu0 0
  %647 = vmatpush.bf16.xpose.msra.mxu0 0
  %648 = vmatpush.bf16.xpose.msra.mxu0 %v229
  %649 = vmatmul.bf16.gmra.mxu0 %v168
  %v650 = vpop.f32.mrf.mxu0
  %v651 = vadd.f32 %v638, %v650
  %v652 = vpop.f32.mrf.mxu0
  %653 = vdwg.mxu0
  %654 = vmatpush.bf16.xpose.msra.mxu0 0
  %655 = vmatpush.bf16.xpose.msra.mxu0 0
  %656 = vmatpush.bf16.xpose.msra.mxu0 0
  %657 = vmatpush.bf16.xpose.msra.mxu0 0
  %658 = vmatpush.bf16.xpose.msra.mxu0 0
  %659 = vmatpush.bf16.xpose.msra.mxu0 0
  %660 = vmatpush.bf16.xpose.msra.mxu0 0
  %661 = vmatpush.bf16.xpose.msra.mxu0 %v230
  %662 = vmatmul.bf16.gmra.mxu0 %v169
  %v663 = vpop.f32.mrf.mxu0
  %v664 = vadd.f32 %v651, %v663
  %v665 = vpop.f32.mrf.mxu0
  %666 = vdwg.mxu0
  %667 = vmatpush.bf16.xpose.msra.mxu0 0
  %668 = vmatpush.bf16.xpose.msra.mxu0 0
  %669 = vmatpush.bf16.xpose.msra.mxu0 0
  %670 = vmatpush.bf16.xpose.msra.mxu0 0
  %671 = vmatpush.bf16.xpose.msra.mxu0 0
  %672 = vmatpush.bf16.xpose.msra.mxu0 0
  %673 = vmatpush.bf16.xpose.msra.mxu0 0
  %674 = vmatpush.bf16.xpose.msra.mxu0 %v231
  %675 = vmatmul.bf16.gmra.mxu0 %v170
  %v676 = vpop.f32.mrf.mxu0
  %v677 = vadd.f32 %v664, %v676
  %v678 = vpop.f32.mrf.mxu0
  %679 = vdwg.mxu0
  %v680 = vmax.f32 %v677, 0.0
  %v681 = vld [vmem:[%s3] sm:$0xf]
  %v682 = vld [vmem:[%s4] sm:$0x1]
  %v684 = vperm.slane %v682, 0
  %vm686 = vcmask 31744
  %v688 = vsel %vm686, %v680, 0
  %v691 = vsel %vm686, %v681, 0
  %693 = vmatpush.xpose.msra.mxu0 0.0
  %694 = vmatpush.xpose.msra.mxu0 0.0
  %695 = vmatpush.xpose.msra.mxu0 0.0
  %696 = vmatpush.xpose.msra.mxu0 0.0
  %697 = vmatpush.xpose.msra.mxu0 0.0
  %698 = vmatpush.xpose.msra.mxu0 0.0
  %699 = vmatpush.xpose.msra.mxu0 0.0
  %700 = vmatpush.xpose.msra.mxu0 0.0
  %701 = vmatpush.xpose.msra.mxu0 0.0
  %702 = vmatpush.xpose.msra.mxu0 0.0
  %703 = vmatpush.xpose.msra.mxu0 0.0
  %704 = vmatpush.xpose.msra.mxu0 0.0
  %705 = vmatpush.xpose.msra.mxu0 0.0
  %706 = vmatpush.xpose.msra.mxu0 0.0
  %707 = vmatpush.xpose.msra.mxu0 0.0
  %708 = vmatpush.xpose.msra.mxu0 %v691
  %709 = vmatmul.f32.gmra.mxu0 %v688
  %v710 = vpop.f32.mrf.mxu0
  %v711 = vadd.f32 %v684, %v710
  %712 = vdwg.mxu0
  %v713 = vmax.f32 %v711, 0.0
  %v714 = vld [vmem:[%s5] sm:$0xff]
  %v715 = vld [vmem:[%s5 + $0x8] sm:$0xff]
  %v716 = vld [vmem:[%s5 + $0x10] sm:$0xff]
  %v717 = vld [vmem:[%s5 + $0x18] sm:$0xff]
  %v718 = vld [vmem:[%s5 + $0x20] sm:$0xff]
  %v719 = vld [vmem:[%s5 + $0x28] sm:$0xff]
  %v720 = vld [vmem:[%s5 + $0x30] sm:$0xff]
  %v721 = vld [vmem:[%s5 + $0x38] sm:$0xff]
  %v722 = vld [vmem:[%s5 + $0x40] sm:$0xff]
  %v723 = vld [vmem:[%s5 + $0x48] sm:$0xff]
  %v724 = vld [vmem:[%s5 + $0x50] sm:$0xff]
  %v725 = vld [vmem:[%s5 + $0x58] sm:$0xff]
  %v726 = vld [vmem:[%s5 + $0x60] sm:$0xff]
  %v727 = vld [vmem:[%s5 + $0x68] sm:$0xff]
  %v728 = vld [vmem:[%s5 + $0x70] sm:$0xff]
  %v729 = vld [vmem:[%s5 + $0x78] sm:$0xff]
  %v730 = vld [vmem:[%s6] sm:$0xff]
  %v731 = vld [vmem:[%s6 + $0x8] sm:$0xff]
  %v732 = vld [vmem:[%s6 + $0x10] sm:$0xff]
  %v733 = vld [vmem:[%s6 + $0x18] sm:$0xff]
  %v738 = vperm.slane %v730, 0
  %v739 = vperm.slane %v730, 1
  %v740 = vperm.slane %v730, 2
  %v741 = vperm.slane %v730, 3
  %v742 = vperm.slane %v730, 4
  %v743 = vperm.slane %v730, 5
  %v744 = vperm.slane %v730, 6
  %v745 = vperm.slane %v730, 7
  %v746 = vperm.slane %v731, 0
  %v747 = vperm.slane %v731, 1
  %v748 = vperm.slane %v731, 2
  %v749 = vperm.slane %v731, 3
  %v750 = vperm.slane %v731, 4
  %v751 = vperm.slane %v731, 5
  %v752 = vperm.slane %v731, 6
  %v753 = vperm.slane %v731, 7
  %v754 = vperm.slane %v732, 0
  %v755 = vperm.slane %v732, 1
  %v756 = vperm.slane %v732, 2
  %v757 = vperm.slane %v732, 3
  %v758 = vperm.slane %v732, 4
  %v759 = vperm.slane %v732, 5
  %v760 = vperm.slane %v732, 6
  %v761 = vperm.slane %v732, 7
  %v762 = vperm.slane %v733, 0
  %v763 = vperm.slane %v733, 1
  %v764 = vperm.slane %v733, 2
  %v765 = vperm.slane %v733, 3
  %v766 = vperm.slane %v733, 4
  %v767 = vperm.slane %v733, 5
  %v768 = vperm.slane %v733, 6
  %v769 = vperm.slane %v733, 7
  %818 = vst [vmem:[#allocation1] ss:$2 sm:$0xff] %v714
  %s819 = scalar_lea.vmem [#allocation1], 16
  %820 = vst [vmem:[%s819] ss:$2 sm:$0xff] %v715
  %s821 = scalar_lea.vmem [#allocation1], 32
  %822 = vst [vmem:[%s821] ss:$2 sm:$0xff] %v716
  %s823 = scalar_lea.vmem [#allocation1], 48
  %824 = vst [vmem:[%s823] ss:$2 sm:$0xff] %v717
  %v825 = vld.sshfl [vmem:[#allocation1] sm:$0xff pattern:$0x75316420]
  %v826 = vld.sshfl [vmem:[#allocation1 + $0x8] sm:$0xff pattern:$0x75316420]
  %v827 = vld.sshfl [vmem:[#allocation1 + $0x10] sm:$0xff pattern:$0x75316420]
  %v828 = vld.sshfl [vmem:[#allocation1 + $0x18] sm:$0xff pattern:$0x75316420]
  %v829 = vld.sshfl [vmem:[#allocation1 + $0x20] sm:$0xff pattern:$0x75316420]
  %v830 = vld.sshfl [vmem:[#allocation1 + $0x28] sm:$0xff pattern:$0x75316420]
  %v831 = vld.sshfl [vmem:[#allocation1 + $0x30] sm:$0xff pattern:$0x75316420]
  %v832 = vld.sshfl [vmem:[#allocation1 + $0x38] sm:$0xff pattern:$0x75316420]
  %833 = vst [vmem:[#allocation1] ss:$2 sm:$0xff] %v718
  %834 = vst [vmem:[%s819] ss:$2 sm:$0xff] %v719
  %835 = vst [vmem:[%s821] ss:$2 sm:$0xff] %v720
  %836 = vst [vmem:[%s823] ss:$2 sm:$0xff] %v721
  %v837 = vld.sshfl [vmem:[#allocation1] sm:$0xff pattern:$0x75316420]
  %v838 = vld.sshfl [vmem:[#allocation1 + $0x8] sm:$0xff pattern:$0x75316420]
  %v839 = vld.sshfl [vmem:[#allocation1 + $0x10] sm:$0xff pattern:$0x75316420]
  %v840 = vld.sshfl [vmem:[#allocation1 + $0x18] sm:$0xff pattern:$0x75316420]
  %v841 = vld.sshfl [vmem:[#allocation1 + $0x20] sm:$0xff pattern:$0x75316420]
  %v842 = vld.sshfl [vmem:[#allocation1 + $0x28] sm:$0xff pattern:$0x75316420]
  %v843 = vld.sshfl [vmem:[#allocation1 + $0x30] sm:$0xff pattern:$0x75316420]
  %v844 = vld.sshfl [vmem:[#allocation1 + $0x38] sm:$0xff pattern:$0x75316420]
  %845 = vst [vmem:[#allocation1] ss:$2 sm:$0xff] %v722
  %846 = vst [vmem:[%s819] ss:$2 sm:$0xff] %v723
  %847 = vst [vmem:[%s821] ss:$2 sm:$0xff] %v724
  %848 = vst [vmem:[%s823] ss:$2 sm:$0xff] %v725
  %v849 = vld.sshfl [vmem:[#allocation1] sm:$0xff pattern:$0x75316420]
  %v850 = vld.sshfl [vmem:[#allocation1 + $0x8] sm:$0xff pattern:$0x75316420]
  %v851 = vld.sshfl [vmem:[#allocation1 + $0x10] sm:$0xff pattern:$0x75316420]
  %v852 = vld.sshfl [vmem:[#allocation1 + $0x18] sm:$0xff pattern:$0x75316420]
  %v853 = vld.sshfl [vmem:[#allocation1 + $0x20] sm:$0xff pattern:$0x75316420]
  %v854 = vld.sshfl [vmem:[#allocation1 + $0x28] sm:$0xff pattern:$0x75316420]
  %v855 = vld.sshfl [vmem:[#allocation1 + $0x30] sm:$0xff pattern:$0x75316420]
  %v856 = vld.sshfl [vmem:[#allocation1 + $0x38] sm:$0xff pattern:$0x75316420]
  %857 = vst [vmem:[#allocation1] ss:$2 sm:$0xff] %v726
  %858 = vst [vmem:[%s819] ss:$2 sm:$0xff] %v727
  %859 = vst [vmem:[%s821] ss:$2 sm:$0xff] %v728
  %860 = vst [vmem:[%s823] ss:$2 sm:$0xff] %v729
  %v861 = vld.sshfl [vmem:[#allocation1] sm:$0xff pattern:$0x75316420]
  %v862 = vld.sshfl [vmem:[#allocation1 + $0x8] sm:$0xff pattern:$0x75316420]
  %v863 = vld.sshfl [vmem:[#allocation1 + $0x10] sm:$0xff pattern:$0x75316420]
  %v864 = vld.sshfl [vmem:[#allocation1 + $0x18] sm:$0xff pattern:$0x75316420]
  %v865 = vld.sshfl [vmem:[#allocation1 + $0x20] sm:$0xff pattern:$0x75316420]
  %v866 = vld.sshfl [vmem:[#allocation1 + $0x28] sm:$0xff pattern:$0x75316420]
  %v867 = vld.sshfl [vmem:[#allocation1 + $0x30] sm:$0xff pattern:$0x75316420]
  %v868 = vld.sshfl [vmem:[#allocation1 + $0x38] sm:$0xff pattern:$0x75316420]
  %v870 = vsel %vm686, %v713, 0
  %vm872 = vcmask 1043456
  %v873 = vsel %vm872, %v825, 0
  %v875 = vsel %vm872, %v826, 0
  %v877 = vsel %vm872, %v827, 0
  %v879 = vsel %vm872, %v828, 0
  %v881 = vsel %vm872, %v829, 0
  %v883 = vsel %vm872, %v830, 0
  %v885 = vsel %vm872, %v831, 0
  %v887 = vsel %vm872, %v832, 0
  %v889 = vsel %vm872, %v837, 0
  %v891 = vsel %vm872, %v838, 0
  %v893 = vsel %vm872, %v839, 0
  %v895 = vsel %vm872, %v840, 0
  %v897 = vsel %vm872, %v841, 0
  %v899 = vsel %vm872, %v842, 0
  %v901 = vsel %vm872, %v843, 0
  %v903 = vsel %vm872, %v844, 0
  %v905 = vsel %vm872, %v849, 0
  %v907 = vsel %vm872, %v850, 0
  %v909 = vsel %vm872, %v851, 0
  %v911 = vsel %vm872, %v852, 0
  %v913 = vsel %vm872, %v853, 0
  %v915 = vsel %vm872, %v854, 0
  %v917 = vsel %vm872, %v855, 0
  %v919 = vsel %vm872, %v856, 0
  %v921 = vsel %vm872, %v861, 0
  %v923 = vsel %vm872, %v862, 0
  %v925 = vsel %vm872, %v863, 0
  %v927 = vsel %vm872, %v864, 0
  %v929 = vsel %vm872, %v865, 0
  %v931 = vsel %vm872, %v866, 0
  %v933 = vsel %vm872, %v867, 0
  %v935 = vsel %vm872, %v868, 0
  %937 = vmatpush.msra.mxu0 0.0
  %938 = vmatpush.msra.mxu0 0.0
  %939 = vmatpush.msra.mxu0 0.0
  %940 = vmatpush.msra.mxu0 0.0
  %941 = vmatpush.msra.mxu0 0.0
  %942 = vmatpush.msra.mxu0 0.0
  %943 = vmatpush.msra.mxu0 0.0
  %944 = vmatpush.msra.mxu0 0.0
  %945 = vmatpush.msra.mxu0 0.0
  %946 = vmatpush.msra.mxu0 0.0
  %947 = vmatpush.msra.mxu0 0.0
  %948 = vmatpush.msra.mxu0 0.0
  %949 = vmatpush.msra.mxu0 0.0
  %950 = vmatpush.msra.mxu0 0.0
  %951 = vmatpush.msra.mxu0 0.0
  %952 = vmatpush.msra.mxu0 %v873
  %953 = vmatmul.f32.gmra.mxu0 %v870
  %v954 = vpop.f32.mrf.mxu0
  %v955 = vadd.f32 %v738, %v954
  %956 = vdwg.mxu0
  %957 = vmatpush.msra.mxu0 0.0
  %958 = vmatpush.msra.mxu0 0.0
  %959 = vmatpush.msra.mxu0 0.0
  %960 = vmatpush.msra.mxu0 0.0
  %961 = vmatpush.msra.mxu0 0.0
  %962 = vmatpush.msra.mxu0 0.0
  %963 = vmatpush.msra.mxu0 0.0
  %964 = vmatpush.msra.mxu0 0.0
  %965 = vmatpush.msra.mxu0 0.0
  %966 = vmatpush.msra.mxu0 0.0
  %967 = vmatpush.msra.mxu0 0.0
  %968 = vmatpush.msra.mxu0 0.0
  %969 = vmatpush.msra.mxu0 0.0
  %970 = vmatpush.msra.mxu0 0.0
  %971 = vmatpush.msra.mxu0 0.0
  %972 = vmatpush.msra.mxu0 %v875
  %973 = vmatmul.f32.gmra.mxu0 %v870
  %v974 = vpop.f32.mrf.mxu0
  %v975 = vadd.f32 %v739, %v974
  %976 = vdwg.mxu0
  %977 = vmatpush.msra.mxu0 0.0
  %978 = vmatpush.msra.mxu0 0.0
  %979 = vmatpush.msra.mxu0 0.0
  %980 = vmatpush.msra.mxu0 0.0
  %981 = vmatpush.msra.mxu0 0.0
  %982 = vmatpush.msra.mxu0 0.0
  %983 = vmatpush.msra.mxu0 0.0
  %984 = vmatpush.msra.mxu0 0.0
  %985 = vmatpush.msra.mxu0 0.0
  %986 = vmatpush.msra.mxu0 0.0
  %987 = vmatpush.msra.mxu0 0.0
  %988 = vmatpush.msra.mxu0 0.0
  %989 = vmatpush.msra.mxu0 0.0
  %990 = vmatpush.msra.mxu0 0.0
  %991 = vmatpush.msra.mxu0 0.0
  %992 = vmatpush.msra.mxu0 %v877
  %993 = vmatmul.f32.gmra.mxu0 %v870
  %v994 = vpop.f32.mrf.mxu0
  %v995 = vadd.f32 %v740, %v994
  %996 = vdwg.mxu0
  %997 = vmatpush.msra.mxu0 0.0
  %998 = vmatpush.msra.mxu0 0.0
  %999 = vmatpush.msra.mxu0 0.0
  %1000 = vmatpush.msra.mxu0 0.0
  %1001 = vmatpush.msra.mxu0 0.0
  %1002 = vmatpush.msra.mxu0 0.0
  %1003 = vmatpush.msra.mxu0 0.0
  %1004 = vmatpush.msra.mxu0 0.0
  %1005 = vmatpush.msra.mxu0 0.0
  %1006 = vmatpush.msra.mxu0 0.0
  %1007 = vmatpush.msra.mxu0 0.0
  %1008 = vmatpush.msra.mxu0 0.0
  %1009 = vmatpush.msra.mxu0 0.0
  %1010 = vmatpush.msra.mxu0 0.0
  %1011 = vmatpush.msra.mxu0 0.0
  %1012 = vmatpush.msra.mxu0 %v879
  %1013 = vmatmul.f32.gmra.mxu0 %v870
  %v1014 = vpop.f32.mrf.mxu0
  %v1015 = vadd.f32 %v741, %v1014
  %1016 = vdwg.mxu0
  %1017 = vmatpush.msra.mxu0 0.0
  %1018 = vmatpush.msra.mxu0 0.0
  %1019 = vmatpush.msra.mxu0 0.0
  %1020 = vmatpush.msra.mxu0 0.0
  %1021 = vmatpush.msra.mxu0 0.0
  %1022 = vmatpush.msra.mxu0 0.0
  %1023 = vmatpush.msra.mxu0 0.0
  %1024 = vmatpush.msra.mxu0 0.0
  %1025 = vmatpush.msra.mxu0 0.0
  %1026 = vmatpush.msra.mxu0 0.0
  %1027 = vmatpush.msra.mxu0 0.0
  %1028 = vmatpush.msra.mxu0 0.0
  %1029 = vmatpush.msra.mxu0 0.0
  %1030 = vmatpush.msra.mxu0 0.0
  %1031 = vmatpush.msra.mxu0 0.0
  %1032 = vmatpush.msra.mxu0 %v881
  %1033 = vmatmul.f32.gmra.mxu0 %v870
  %v1034 = vpop.f32.mrf.mxu0
  %v1035 = vadd.f32 %v742, %v1034
  %1036 = vdwg.mxu0
  %1037 = vmatpush.msra.mxu0 0.0
  %1038 = vmatpush.msra.mxu0 0.0
  %1039 = vmatpush.msra.mxu0 0.0
  %1040 = vmatpush.msra.mxu0 0.0
  %1041 = vmatpush.msra.mxu0 0.0
  %1042 = vmatpush.msra.mxu0 0.0
  %1043 = vmatpush.msra.mxu0 0.0
  %1044 = vmatpush.msra.mxu0 0.0
  %1045 = vmatpush.msra.mxu0 0.0
  %1046 = vmatpush.msra.mxu0 0.0
  %1047 = vmatpush.msra.mxu0 0.0
  %1048 = vmatpush.msra.mxu0 0.0
  %1049 = vmatpush.msra.mxu0 0.0
  %1050 = vmatpush.msra.mxu0 0.0
  %1051 = vmatpush.msra.mxu0 0.0
  %1052 = vmatpush.msra.mxu0 %v883
  %1053 = vmatmul.f32.gmra.mxu0 %v870
  %v1054 = vpop.f32.mrf.mxu0
  %v1055 = vadd.f32 %v743, %v1054
  %1056 = vdwg.mxu0
  %1057 = vmatpush.msra.mxu0 0.0
  %1058 = vmatpush.msra.mxu0 0.0
  %1059 = vmatpush.msra.mxu0 0.0
  %1060 = vmatpush.msra.mxu0 0.0
  %1061 = vmatpush.msra.mxu0 0.0
  %1062 = vmatpush.msra.mxu0 0.0
  %1063 = vmatpush.msra.mxu0 0.0
  %1064 = vmatpush.msra.mxu0 0.0
  %1065 = vmatpush.msra.mxu0 0.0
  %1066 = vmatpush.msra.mxu0 0.0
  %1067 = vmatpush.msra.mxu0 0.0
  %1068 = vmatpush.msra.mxu0 0.0
  %1069 = vmatpush.msra.mxu0 0.0
  %1070 = vmatpush.msra.mxu0 0.0
  %1071 = vmatpush.msra.mxu0 0.0
  %1072 = vmatpush.msra.mxu0 %v885
  %1073 = vmatmul.f32.gmra.mxu0 %v870
  %v1074 = vpop.f32.mrf.mxu0
  %v1075 = vadd.f32 %v744, %v1074
  %1076 = vdwg.mxu0
  %1077 = vmatpush.msra.mxu0 0.0
  %1078 = vmatpush.msra.mxu0 0.0
  %1079 = vmatpush.msra.mxu0 0.0
  %1080 = vmatpush.msra.mxu0 0.0
  %1081 = vmatpush.msra.mxu0 0.0
  %1082 = vmatpush.msra.mxu0 0.0
  %1083 = vmatpush.msra.mxu0 0.0
  %1084 = vmatpush.msra.mxu0 0.0
  %1085 = vmatpush.msra.mxu0 0.0
  %1086 = vmatpush.msra.mxu0 0.0
  %1087 = vmatpush.msra.mxu0 0.0
  %1088 = vmatpush.msra.mxu0 0.0
  %1089 = vmatpush.msra.mxu0 0.0
  %1090 = vmatpush.msra.mxu0 0.0
  %1091 = vmatpush.msra.mxu0 0.0
  %1092 = vmatpush.msra.mxu0 %v887
  %1093 = vmatmul.f32.gmra.mxu0 %v870
  %v1094 = vpop.f32.mrf.mxu0
  %v1095 = vadd.f32 %v745, %v1094
  %1096 = vdwg.mxu0
  %1097 = vmatpush.msra.mxu0 0.0
  %1098 = vmatpush.msra.mxu0 0.0
  %1099 = vmatpush.msra.mxu0 0.0
  %1100 = vmatpush.msra.mxu0 0.0
  %1101 = vmatpush.msra.mxu0 0.0
  %1102 = vmatpush.msra.mxu0 0.0
  %1103 = vmatpush.msra.mxu0 0.0
  %1104 = vmatpush.msra.mxu0 0.0
  %1105 = vmatpush.msra.mxu0 0.0
  %1106 = vmatpush.msra.mxu0 0.0
  %1107 = vmatpush.msra.mxu0 0.0
  %1108 = vmatpush.msra.mxu0 0.0
  %1109 = vmatpush.msra.mxu0 0.0
  %1110 = vmatpush.msra.mxu0 0.0
  %1111 = vmatpush.msra.mxu0 0.0
  %1112 = vmatpush.msra.mxu0 %v889
  %1113 = vmatmul.f32.gmra.mxu0 %v870
  %v1114 = vpop.f32.mrf.mxu0
  %v1115 = vadd.f32 %v746, %v1114
  %1116 = vdwg.mxu0
  %1117 = vmatpush.msra.mxu0 0.0
  %1118 = vmatpush.msra.mxu0 0.0
  %1119 = vmatpush.msra.mxu0 0.0
  %1120 = vmatpush.msra.mxu0 0.0
  %1121 = vmatpush.msra.mxu0 0.0
  %1122 = vmatpush.msra.mxu0 0.0
  %1123 = vmatpush.msra.mxu0 0.0
  %1124 = vmatpush.msra.mxu0 0.0
  %1125 = vmatpush.msra.mxu0 0.0
  %1126 = vmatpush.msra.mxu0 0.0
  %1127 = vmatpush.msra.mxu0 0.0
  %1128 = vmatpush.msra.mxu0 0.0
  %1129 = vmatpush.msra.mxu0 0.0
  %1130 = vmatpush.msra.mxu0 0.0
  %1131 = vmatpush.msra.mxu0 0.0
  %1132 = vmatpush.msra.mxu0 %v891
  %1133 = vmatmul.f32.gmra.mxu0 %v870
  %v1134 = vpop.f32.mrf.mxu0
  %v1135 = vadd.f32 %v747, %v1134
  %1136 = vdwg.mxu0
  %1137 = vmatpush.msra.mxu0 0.0
  %1138 = vmatpush.msra.mxu0 0.0
  %1139 = vmatpush.msra.mxu0 0.0
  %1140 = vmatpush.msra.mxu0 0.0
  %1141 = vmatpush.msra.mxu0 0.0
  %1142 = vmatpush.msra.mxu0 0.0
  %1143 = vmatpush.msra.mxu0 0.0
  %1144 = vmatpush.msra.mxu0 0.0
  %1145 = vmatpush.msra.mxu0 0.0
  %1146 = vmatpush.msra.mxu0 0.0
  %1147 = vmatpush.msra.mxu0 0.0
  %1148 = vmatpush.msra.mxu0 0.0
  %1149 = vmatpush.msra.mxu0 0.0
  %1150 = vmatpush.msra.mxu0 0.0
  %1151 = vmatpush.msra.mxu0 0.0
  %1152 = vmatpush.msra.mxu0 %v893
  %1153 = vmatmul.f32.gmra.mxu0 %v870
  %v1154 = vpop.f32.mrf.mxu0
  %v1155 = vadd.f32 %v748, %v1154
  %1156 = vdwg.mxu0
  %1157 = vmatpush.msra.mxu0 0.0
  %1158 = vmatpush.msra.mxu0 0.0
  %1159 = vmatpush.msra.mxu0 0.0
  %1160 = vmatpush.msra.mxu0 0.0
  %1161 = vmatpush.msra.mxu0 0.0
  %1162 = vmatpush.msra.mxu0 0.0
  %1163 = vmatpush.msra.mxu0 0.0
  %1164 = vmatpush.msra.mxu0 0.0
  %1165 = vmatpush.msra.mxu0 0.0
  %1166 = vmatpush.msra.mxu0 0.0
  %1167 = vmatpush.msra.mxu0 0.0
  %1168 = vmatpush.msra.mxu0 0.0
  %1169 = vmatpush.msra.mxu0 0.0
  %1170 = vmatpush.msra.mxu0 0.0
  %1171 = vmatpush.msra.mxu0 0.0
  %1172 = vmatpush.msra.mxu0 %v895
  %1173 = vmatmul.f32.gmra.mxu0 %v870
  %v1174 = vpop.f32.mrf.mxu0
  %v1175 = vadd.f32 %v749, %v1174
  %1176 = vdwg.mxu0
  %1177 = vmatpush.msra.mxu0 0.0
  %1178 = vmatpush.msra.mxu0 0.0
  %1179 = vmatpush.msra.mxu0 0.0
  %1180 = vmatpush.msra.mxu0 0.0
  %1181 = vmatpush.msra.mxu0 0.0
  %1182 = vmatpush.msra.mxu0 0.0
  %1183 = vmatpush.msra.mxu0 0.0
  %1184 = vmatpush.msra.mxu0 0.0
  %1185 = vmatpush.msra.mxu0 0.0
  %1186 = vmatpush.msra.mxu0 0.0
  %1187 = vmatpush.msra.mxu0 0.0
  %1188 = vmatpush.msra.mxu0 0.0
  %1189 = vmatpush.msra.mxu0 0.0
  %1190 = vmatpush.msra.mxu0 0.0
  %1191 = vmatpush.msra.mxu0 0.0
  %1192 = vmatpush.msra.mxu0 %v897
  %1193 = vmatmul.f32.gmra.mxu0 %v870
  %v1194 = vpop.f32.mrf.mxu0
  %v1195 = vadd.f32 %v750, %v1194
  %1196 = vdwg.mxu0
  %1197 = vmatpush.msra.mxu0 0.0
  %1198 = vmatpush.msra.mxu0 0.0
  %1199 = vmatpush.msra.mxu0 0.0
  %1200 = vmatpush.msra.mxu0 0.0
  %1201 = vmatpush.msra.mxu0 0.0
  %1202 = vmatpush.msra.mxu0 0.0
  %1203 = vmatpush.msra.mxu0 0.0
  %1204 = vmatpush.msra.mxu0 0.0
  %1205 = vmatpush.msra.mxu0 0.0
  %1206 = vmatpush.msra.mxu0 0.0
  %1207 = vmatpush.msra.mxu0 0.0
  %1208 = vmatpush.msra.mxu0 0.0
  %1209 = vmatpush.msra.mxu0 0.0
  %1210 = vmatpush.msra.mxu0 0.0
  %1211 = vmatpush.msra.mxu0 0.0
  %1212 = vmatpush.msra.mxu0 %v899
  %1213 = vmatmul.f32.gmra.mxu0 %v870
  %v1214 = vpop.f32.mrf.mxu0
  %v1215 = vadd.f32 %v751, %v1214
  %1216 = vdwg.mxu0
  %1217 = vmatpush.msra.mxu0 0.0
  %1218 = vmatpush.msra.mxu0 0.0
  %1219 = vmatpush.msra.mxu0 0.0
  %1220 = vmatpush.msra.mxu0 0.0
  %1221 = vmatpush.msra.mxu0 0.0
  %1222 = vmatpush.msra.mxu0 0.0
  %1223 = vmatpush.msra.mxu0 0.0
  %1224 = vmatpush.msra.mxu0 0.0
  %1225 = vmatpush.msra.mxu0 0.0
  %1226 = vmatpush.msra.mxu0 0.0
  %1227 = vmatpush.msra.mxu0 0.0
  %1228 = vmatpush.msra.mxu0 0.0
  %1229 = vmatpush.msra.mxu0 0.0
  %1230 = vmatpush.msra.mxu0 0.0
  %1231 = vmatpush.msra.mxu0 0.0
  %1232 = vmatpush.msra.mxu0 %v901
  %1233 = vmatmul.f32.gmra.mxu0 %v870
  %v1234 = vpop.f32.mrf.mxu0
  %v1235 = vadd.f32 %v752, %v1234
  %1236 = vdwg.mxu0
  %1237 = vmatpush.msra.mxu0 0.0
  %1238 = vmatpush.msra.mxu0 0.0
  %1239 = vmatpush.msra.mxu0 0.0
  %1240 = vmatpush.msra.mxu0 0.0
  %1241 = vmatpush.msra.mxu0 0.0
  %1242 = vmatpush.msra.mxu0 0.0
  %1243 = vmatpush.msra.mxu0 0.0
  %1244 = vmatpush.msra.mxu0 0.0
  %1245 = vmatpush.msra.mxu0 0.0
  %1246 = vmatpush.msra.mxu0 0.0
  %1247 = vmatpush.msra.mxu0 0.0
  %1248 = vmatpush.msra.mxu0 0.0
  %1249 = vmatpush.msra.mxu0 0.0
  %1250 = vmatpush.msra.mxu0 0.0
  %1251 = vmatpush.msra.mxu0 0.0
  %1252 = vmatpush.msra.mxu0 %v903
  %1253 = vmatmul.f32.gmra.mxu0 %v870
  %v1254 = vpop.f32.mrf.mxu0
  %v1255 = vadd.f32 %v753, %v1254
  %1256 = vdwg.mxu0
  %1257 = vmatpush.msra.mxu0 0.0
  %1258 = vmatpush.msra.mxu0 0.0
  %1259 = vmatpush.msra.mxu0 0.0
  %1260 = vmatpush.msra.mxu0 0.0
  %1261 = vmatpush.msra.mxu0 0.0
  %1262 = vmatpush.msra.mxu0 0.0
  %1263 = vmatpush.msra.mxu0 0.0
  %1264 = vmatpush.msra.mxu0 0.0
  %1265 = vmatpush.msra.mxu0 0.0
  %1266 = vmatpush.msra.mxu0 0.0
  %1267 = vmatpush.msra.mxu0 0.0
  %1268 = vmatpush.msra.mxu0 0.0
  %1269 = vmatpush.msra.mxu0 0.0
  %1270 = vmatpush.msra.mxu0 0.0
  %1271 = vmatpush.msra.mxu0 0.0
  %1272 = vmatpush.msra.mxu0 %v905
  %1273 = vmatmul.f32.gmra.mxu0 %v870
  %v1274 = vpop.f32.mrf.mxu0
  %v1275 = vadd.f32 %v754, %v1274
  %1276 = vdwg.mxu0
  %1277 = vmatpush.msra.mxu0 0.0
  %1278 = vmatpush.msra.mxu0 0.0
  %1279 = vmatpush.msra.mxu0 0.0
  %1280 = vmatpush.msra.mxu0 0.0
  %1281 = vmatpush.msra.mxu0 0.0
  %1282 = vmatpush.msra.mxu0 0.0
  %1283 = vmatpush.msra.mxu0 0.0
  %1284 = vmatpush.msra.mxu0 0.0
  %1285 = vmatpush.msra.mxu0 0.0
  %1286 = vmatpush.msra.mxu0 0.0
  %1287 = vmatpush.msra.mxu0 0.0
  %1288 = vmatpush.msra.mxu0 0.0
  %1289 = vmatpush.msra.mxu0 0.0
  %1290 = vmatpush.msra.mxu0 0.0
  %1291 = vmatpush.msra.mxu0 0.0
  %1292 = vmatpush.msra.mxu0 %v907
  %1293 = vmatmul.f32.gmra.mxu0 %v870
  %v1294 = vpop.f32.mrf.mxu0
  %v1295 = vadd.f32 %v755, %v1294
  %1296 = vdwg.mxu0
  %1297 = vmatpush.msra.mxu0 0.0
  %1298 = vmatpush.msra.mxu0 0.0
  %1299 = vmatpush.msra.mxu0 0.0
  %1300 = vmatpush.msra.mxu0 0.0
  %1301 = vmatpush.msra.mxu0 0.0
  %1302 = vmatpush.msra.mxu0 0.0
  %1303 = vmatpush.msra.mxu0 0.0
  %1304 = vmatpush.msra.mxu0 0.0
  %1305 = vmatpush.msra.mxu0 0.0
  %1306 = vmatpush.msra.mxu0 0.0
  %1307 = vmatpush.msra.mxu0 0.0
  %1308 = vmatpush.msra.mxu0 0.0
  %1309 = vmatpush.msra.mxu0 0.0
  %1310 = vmatpush.msra.mxu0 0.0
  %1311 = vmatpush.msra.mxu0 0.0
  %1312 = vmatpush.msra.mxu0 %v909
  %1313 = vmatmul.f32.gmra.mxu0 %v870
  %v1314 = vpop.f32.mrf.mxu0
  %v1315 = vadd.f32 %v756, %v1314
  %1316 = vdwg.mxu0
  %1317 = vmatpush.msra.mxu0 0.0
  %1318 = vmatpush.msra.mxu0 0.0
  %1319 = vmatpush.msra.mxu0 0.0
  %1320 = vmatpush.msra.mxu0 0.0
  %1321 = vmatpush.msra.mxu0 0.0
  %1322 = vmatpush.msra.mxu0 0.0
  %1323 = vmatpush.msra.mxu0 0.0
  %1324 = vmatpush.msra.mxu0 0.0
  %1325 = vmatpush.msra.mxu0 0.0
  %1326 = vmatpush.msra.mxu0 0.0
  %1327 = vmatpush.msra.mxu0 0.0
  %1328 = vmatpush.msra.mxu0 0.0
  %1329 = vmatpush.msra.mxu0 0.0
  %1330 = vmatpush.msra.mxu0 0.0
  %1331 = vmatpush.msra.mxu0 0.0
  %1332 = vmatpush.msra.mxu0 %v911
  %1333 = vmatmul.f32.gmra.mxu0 %v870
  %v1334 = vpop.f32.mrf.mxu0
  %v1335 = vadd.f32 %v757, %v1334
  %1336 = vdwg.mxu0
  %1337 = vmatpush.msra.mxu0 0.0
  %1338 = vmatpush.msra.mxu0 0.0
  %1339 = vmatpush.msra.mxu0 0.0
  %1340 = vmatpush.msra.mxu0 0.0
  %1341 = vmatpush.msra.mxu0 0.0
  %1342 = vmatpush.msra.mxu0 0.0
  %1343 = vmatpush.msra.mxu0 0.0
  %1344 = vmatpush.msra.mxu0 0.0
  %1345 = vmatpush.msra.mxu0 0.0
  %1346 = vmatpush.msra.mxu0 0.0
  %1347 = vmatpush.msra.mxu0 0.0
  %1348 = vmatpush.msra.mxu0 0.0
  %1349 = vmatpush.msra.mxu0 0.0
  %1350 = vmatpush.msra.mxu0 0.0
  %1351 = vmatpush.msra.mxu0 0.0
  %1352 = vmatpush.msra.mxu0 %v913
  %1353 = vmatmul.f32.gmra.mxu0 %v870
  %v1354 = vpop.f32.mrf.mxu0
  %v1355 = vadd.f32 %v758, %v1354
  %1356 = vdwg.mxu0
  %1357 = vmatpush.msra.mxu0 0.0
  %1358 = vmatpush.msra.mxu0 0.0
  %1359 = vmatpush.msra.mxu0 0.0
  %1360 = vmatpush.msra.mxu0 0.0
  %1361 = vmatpush.msra.mxu0 0.0
  %1362 = vmatpush.msra.mxu0 0.0
  %1363 = vmatpush.msra.mxu0 0.0
  %1364 = vmatpush.msra.mxu0 0.0
  %1365 = vmatpush.msra.mxu0 0.0
  %1366 = vmatpush.msra.mxu0 0.0
  %1367 = vmatpush.msra.mxu0 0.0
  %1368 = vmatpush.msra.mxu0 0.0
  %1369 = vmatpush.msra.mxu0 0.0
  %1370 = vmatpush.msra.mxu0 0.0
  %1371 = vmatpush.msra.mxu0 0.0
  %1372 = vmatpush.msra.mxu0 %v915
  %1373 = vmatmul.f32.gmra.mxu0 %v870
  %v1374 = vpop.f32.mrf.mxu0
  %v1375 = vadd.f32 %v759, %v1374
  %1376 = vdwg.mxu0
  %1377 = vmatpush.msra.mxu0 0.0
  %1378 = vmatpush.msra.mxu0 0.0
  %1379 = vmatpush.msra.mxu0 0.0
  %1380 = vmatpush.msra.mxu0 0.0
  %1381 = vmatpush.msra.mxu0 0.0
  %1382 = vmatpush.msra.mxu0 0.0
  %1383 = vmatpush.msra.mxu0 0.0
  %1384 = vmatpush.msra.mxu0 0.0
  %1385 = vmatpush.msra.mxu0 0.0
  %1386 = vmatpush.msra.mxu0 0.0
  %1387 = vmatpush.msra.mxu0 0.0
  %1388 = vmatpush.msra.mxu0 0.0
  %1389 = vmatpush.msra.mxu0 0.0
  %1390 = vmatpush.msra.mxu0 0.0
  %1391 = vmatpush.msra.mxu0 0.0
  %1392 = vmatpush.msra.mxu0 %v917
  %1393 = vmatmul.f32.gmra.mxu0 %v870
  %v1394 = vpop.f32.mrf.mxu0
  %v1395 = vadd.f32 %v760, %v1394
  %1396 = vdwg.mxu0
  %1397 = vmatpush.msra.mxu0 0.0
  %1398 = vmatpush.msra.mxu0 0.0
  %1399 = vmatpush.msra.mxu0 0.0
  %1400 = vmatpush.msra.mxu0 0.0
  %1401 = vmatpush.msra.mxu0 0.0
  %1402 = vmatpush.msra.mxu0 0.0
  %1403 = vmatpush.msra.mxu0 0.0
  %1404 = vmatpush.msra.mxu0 0.0
  %1405 = vmatpush.msra.mxu0 0.0
  %1406 = vmatpush.msra.mxu0 0.0
  %1407 = vmatpush.msra.mxu0 0.0
  %1408 = vmatpush.msra.mxu0 0.0
  %1409 = vmatpush.msra.mxu0 0.0
  %1410 = vmatpush.msra.mxu0 0.0
  %1411 = vmatpush.msra.mxu0 0.0
  %1412 = vmatpush.msra.mxu0 %v919
  %1413 = vmatmul.f32.gmra.mxu0 %v870
  %v1414 = vpop.f32.mrf.mxu0
  %v1415 = vadd.f32 %v761, %v1414
  %1416 = vdwg.mxu0
  %1417 = vmatpush.msra.mxu0 0.0
  %1418 = vmatpush.msra.mxu0 0.0
  %1419 = vmatpush.msra.mxu0 0.0
  %1420 = vmatpush.msra.mxu0 0.0
  %1421 = vmatpush.msra.mxu0 0.0
  %1422 = vmatpush.msra.mxu0 0.0
  %1423 = vmatpush.msra.mxu0 0.0
  %1424 = vmatpush.msra.mxu0 0.0
  %1425 = vmatpush.msra.mxu0 0.0
  %1426 = vmatpush.msra.mxu0 0.0
  %1427 = vmatpush.msra.mxu0 0.0
  %1428 = vmatpush.msra.mxu0 0.0
  %1429 = vmatpush.msra.mxu0 0.0
  %1430 = vmatpush.msra.mxu0 0.0
  %1431 = vmatpush.msra.mxu0 0.0
  %1432 = vmatpush.msra.mxu0 %v921
  %1433 = vmatmul.f32.gmra.mxu0 %v870
  %v1434 = vpop.f32.mrf.mxu0
  %v1435 = vadd.f32 %v762, %v1434
  %1436 = vdwg.mxu0
  %1437 = vmatpush.msra.mxu0 0.0
  %1438 = vmatpush.msra.mxu0 0.0
  %1439 = vmatpush.msra.mxu0 0.0
  %1440 = vmatpush.msra.mxu0 0.0
  %1441 = vmatpush.msra.mxu0 0.0
  %1442 = vmatpush.msra.mxu0 0.0
  %1443 = vmatpush.msra.mxu0 0.0
  %1444 = vmatpush.msra.mxu0 0.0
  %1445 = vmatpush.msra.mxu0 0.0
  %1446 = vmatpush.msra.mxu0 0.0
  %1447 = vmatpush.msra.mxu0 0.0
  %1448 = vmatpush.msra.mxu0 0.0
  %1449 = vmatpush.msra.mxu0 0.0
  %1450 = vmatpush.msra.mxu0 0.0
  %1451 = vmatpush.msra.mxu0 0.0
  %1452 = vmatpush.msra.mxu0 %v923
  %1453 = vmatmul.f32.gmra.mxu0 %v870
  %v1454 = vpop.f32.mrf.mxu0
  %v1455 = vadd.f32 %v763, %v1454
  %1456 = vdwg.mxu0
  %1457 = vmatpush.msra.mxu0 0.0
  %1458 = vmatpush.msra.mxu0 0.0
  %1459 = vmatpush.msra.mxu0 0.0
  %1460 = vmatpush.msra.mxu0 0.0
  %1461 = vmatpush.msra.mxu0 0.0
  %1462 = vmatpush.msra.mxu0 0.0
  %1463 = vmatpush.msra.mxu0 0.0
  %1464 = vmatpush.msra.mxu0 0.0
  %1465 = vmatpush.msra.mxu0 0.0
  %1466 = vmatpush.msra.mxu0 0.0
  %1467 = vmatpush.msra.mxu0 0.0
  %1468 = vmatpush.msra.mxu0 0.0
  %1469 = vmatpush.msra.mxu0 0.0
  %1470 = vmatpush.msra.mxu0 0.0
  %1471 = vmatpush.msra.mxu0 0.0
  %1472 = vmatpush.msra.mxu0 %v925
  %1473 = vmatmul.f32.gmra.mxu0 %v870
  %v1474 = vpop.f32.mrf.mxu0
  %v1475 = vadd.f32 %v764, %v1474
  %1476 = vdwg.mxu0
  %1477 = vmatpush.msra.mxu0 0.0
  %1478 = vmatpush.msra.mxu0 0.0
  %1479 = vmatpush.msra.mxu0 0.0
  %1480 = vmatpush.msra.mxu0 0.0
  %1481 = vmatpush.msra.mxu0 0.0
  %1482 = vmatpush.msra.mxu0 0.0
  %1483 = vmatpush.msra.mxu0 0.0
  %1484 = vmatpush.msra.mxu0 0.0
  %1485 = vmatpush.msra.mxu0 0.0
  %1486 = vmatpush.msra.mxu0 0.0
  %1487 = vmatpush.msra.mxu0 0.0
  %1488 = vmatpush.msra.mxu0 0.0
  %1489 = vmatpush.msra.mxu0 0.0
  %1490 = vmatpush.msra.mxu0 0.0
  %1491 = vmatpush.msra.mxu0 0.0
  %1492 = vmatpush.msra.mxu0 %v927
  %1493 = vmatmul.f32.gmra.mxu0 %v870
  %v1494 = vpop.f32.mrf.mxu0
  %v1495 = vadd.f32 %v765, %v1494
  %1496 = vdwg.mxu0
  %1497 = vmatpush.msra.mxu0 0.0
  %1498 = vmatpush.msra.mxu0 0.0
  %1499 = vmatpush.msra.mxu0 0.0
  %1500 = vmatpush.msra.mxu0 0.0
  %1501 = vmatpush.msra.mxu0 0.0
  %1502 = vmatpush.msra.mxu0 0.0
  %1503 = vmatpush.msra.mxu0 0.0
  %1504 = vmatpush.msra.mxu0 0.0
  %1505 = vmatpush.msra.mxu0 0.0
  %1506 = vmatpush.msra.mxu0 0.0
  %1507 = vmatpush.msra.mxu0 0.0
  %1508 = vmatpush.msra.mxu0 0.0
  %1509 = vmatpush.msra.mxu0 0.0
  %1510 = vmatpush.msra.mxu0 0.0
  %1511 = vmatpush.msra.mxu0 0.0
  %1512 = vmatpush.msra.mxu0 %v929
  %1513 = vmatmul.f32.gmra.mxu0 %v870
  %v1514 = vpop.f32.mrf.mxu0
  %v1515 = vadd.f32 %v766, %v1514
  %1516 = vdwg.mxu0
  %1517 = vmatpush.msra.mxu0 0.0
  %1518 = vmatpush.msra.mxu0 0.0
  %1519 = vmatpush.msra.mxu0 0.0
  %1520 = vmatpush.msra.mxu0 0.0
  %1521 = vmatpush.msra.mxu0 0.0
  %1522 = vmatpush.msra.mxu0 0.0
  %1523 = vmatpush.msra.mxu0 0.0
  %1524 = vmatpush.msra.mxu0 0.0
  %1525 = vmatpush.msra.mxu0 0.0
  %1526 = vmatpush.msra.mxu0 0.0
  %1527 = vmatpush.msra.mxu0 0.0
  %1528 = vmatpush.msra.mxu0 0.0
  %1529 = vmatpush.msra.mxu0 0.0
  %1530 = vmatpush.msra.mxu0 0.0
  %1531 = vmatpush.msra.mxu0 0.0
  %1532 = vmatpush.msra.mxu0 %v931
  %1533 = vmatmul.f32.gmra.mxu0 %v870
  %v1534 = vpop.f32.mrf.mxu0
  %v1535 = vadd.f32 %v767, %v1534
  %1536 = vdwg.mxu0
  %1537 = vmatpush.msra.mxu0 0.0
  %1538 = vmatpush.msra.mxu0 0.0
  %1539 = vmatpush.msra.mxu0 0.0
  %1540 = vmatpush.msra.mxu0 0.0
  %1541 = vmatpush.msra.mxu0 0.0
  %1542 = vmatpush.msra.mxu0 0.0
  %1543 = vmatpush.msra.mxu0 0.0
  %1544 = vmatpush.msra.mxu0 0.0
  %1545 = vmatpush.msra.mxu0 0.0
  %1546 = vmatpush.msra.mxu0 0.0
  %1547 = vmatpush.msra.mxu0 0.0
  %1548 = vmatpush.msra.mxu0 0.0
  %1549 = vmatpush.msra.mxu0 0.0
  %1550 = vmatpush.msra.mxu0 0.0
  %1551 = vmatpush.msra.mxu0 0.0
  %1552 = vmatpush.msra.mxu0 %v933
  %1553 = vmatmul.f32.gmra.mxu0 %v870
  %v1554 = vpop.f32.mrf.mxu0
  %v1555 = vadd.f32 %v768, %v1554
  %1556 = vdwg.mxu0
  %1557 = vmatpush.msra.mxu0 0.0
  %1558 = vmatpush.msra.mxu0 0.0
  %1559 = vmatpush.msra.mxu0 0.0
  %1560 = vmatpush.msra.mxu0 0.0
  %1561 = vmatpush.msra.mxu0 0.0
  %1562 = vmatpush.msra.mxu0 0.0
  %1563 = vmatpush.msra.mxu0 0.0
  %1564 = vmatpush.msra.mxu0 0.0
  %1565 = vmatpush.msra.mxu0 0.0
  %1566 = vmatpush.msra.mxu0 0.0
  %1567 = vmatpush.msra.mxu0 0.0
  %1568 = vmatpush.msra.mxu0 0.0
  %1569 = vmatpush.msra.mxu0 0.0
  %1570 = vmatpush.msra.mxu0 0.0
  %1571 = vmatpush.msra.mxu0 0.0
  %1572 = vmatpush.msra.mxu0 %v935
  %1573 = vmatmul.f32.gmra.mxu0 %v870
  %v1574 = vpop.f32.mrf.mxu0
  %v1575 = vadd.f32 %v769, %v1574
  %1576 = vdwg.mxu0
  %v1577 = vmul.f32 %v955, 0.5
  %v1578 = vmul.f32 %v975, 0.5
  %v1579 = vmul.f32 %v995, 0.5
  %v1580 = vmul.f32 %v1015, 0.5
  %v1581 = vmul.f32 %v1035, 0.5
  %v1582 = vmul.f32 %v1055, 0.5
  %v1583 = vmul.f32 %v1075, 0.5
  %v1584 = vmul.f32 %v1095, 0.5
  %v1585 = vmul.f32 %v1115, 0.5
  %v1586 = vmul.f32 %v1135, 0.5
  %v1587 = vmul.f32 %v1155, 0.5
  %v1588 = vmul.f32 %v1175, 0.5
  %v1589 = vmul.f32 %v1195, 0.5
  %v1590 = vmul.f32 %v1215, 0.5
  %v1591 = vmul.f32 %v1235, 0.5
  %v1592 = vmul.f32 %v1255, 0.5
  %v1593 = vmul.f32 %v1275, 0.5
  %v1594 = vmul.f32 %v1295, 0.5
  %v1595 = vmul.f32 %v1315, 0.5
  %v1596 = vmul.f32 %v1335, 0.5
  %v1597 = vmul.f32 %v1355, 0.5
  %v1598 = vmul.f32 %v1375, 0.5
  %v1599 = vmul.f32 %v1395, 0.5
  %v1600 = vmul.f32 %v1415, 0.5
  %v1601 = vmul.f32 %v1435, 0.5
  %v1602 = vmul.f32 %v1455, 0.5
  %v1603 = vmul.f32 %v1475, 0.5
  %v1604 = vmul.f32 %v1495, 0.5
  %v1605 = vmul.f32 %v1515, 0.5
  %v1606 = vmul.f32 %v1535, 0.5
  %v1607 = vmul.f32 %v1555, 0.5
  %v1608 = vmul.f32 %v1575, 0.5
  %v1609 = vtanh.pop %v1577
  %v1610 = vtanh.pop %v1578
  %v1611 = vtanh.pop %v1579
  %v1612 = vtanh.pop %v1580
  %v1613 = vtanh.pop %v1581
  %v1614 = vtanh.pop %v1582
  %v1615 = vtanh.pop %v1583
  %v1616 = vtanh.pop %v1584
  %v1617 = vtanh.pop %v1585
  %v1618 = vtanh.pop %v1586
  %v1619 = vtanh.pop %v1587
  %v1620 = vtanh.pop %v1588
  %v1621 = vtanh.pop %v1589
  %v1622 = vtanh.pop %v1590
  %v1623 = vtanh.pop %v1591
  %v1624 = vtanh.pop %v1592
  %v1625 = vtanh.pop %v1593
  %v1626 = vtanh.pop %v1594
  %v1627 = vtanh.pop %v1595
  %v1628 = vtanh.pop %v1596
  %v1629 = vtanh.pop %v1597
  %v1630 = vtanh.pop %v1598
  %v1631 = vtanh.pop %v1599
  %v1632 = vtanh.pop %v1600
  %v1633 = vtanh.pop %v1601
  %v1634 = vtanh.pop %v1602
  %v1635 = vtanh.pop %v1603
  %v1636 = vtanh.pop %v1604
  %v1637 = vtanh.pop %v1605
  %v1638 = vtanh.pop %v1606
  %v1639 = vtanh.pop %v1607
  %v1640 = vtanh.pop %v1608
  %v1641 = vadd.f32 %v1609, 1.0
  %v1642 = vadd.f32 %v1610, 1.0
  %v1643 = vadd.f32 %v1611, 1.0
  %v1644 = vadd.f32 %v1612, 1.0
  %v1645 = vadd.f32 %v1613, 1.0
  %v1646 = vadd.f32 %v1614, 1.0
  %v1647 = vadd.f32 %v1615, 1.0
  %v1648 = vadd.f32 %v1616, 1.0
  %v1649 = vadd.f32 %v1617, 1.0
  %v1650 = vadd.f32 %v1618, 1.0
  %v1651 = vadd.f32 %v1619, 1.0
  %v1652 = vadd.f32 %v1620, 1.0
  %v1653 = vadd.f32 %v1621, 1.0
  %v1654 = vadd.f32 %v1622, 1.0
  %v1655 = vadd.f32 %v1623, 1.0
  %v1656 = vadd.f32 %v1624, 1.0
  %v1657 = vadd.f32 %v1625, 1.0
  %v1658 = vadd.f32 %v1626, 1.0
  %v1659 = vadd.f32 %v1627, 1.0
  %v1660 = vadd.f32 %v1628, 1.0
  %v1661 = vadd.f32 %v1629, 1.0
  %v1662 = vadd.f32 %v1630, 1.0
  %v1663 = vadd.f32 %v1631, 1.0
  %v1664 = vadd.f32 %v1632, 1.0
  %v1665 = vadd.f32 %v1633, 1.0
  %v1666 = vadd.f32 %v1634, 1.0
  %v1667 = vadd.f32 %v1635, 1.0
  %v1668 = vadd.f32 %v1636, 1.0
  %v1669 = vadd.f32 %v1637, 1.0
  %v1670 = vadd.f32 %v1638, 1.0
  %v1671 = vadd.f32 %v1639, 1.0
  %v1672 = vadd.f32 %v1640, 1.0
  %v1673 = vmul.f32 %v1641, 0.5
  %v1674 = vmul.f32 %v1642, 0.5
  %v1675 = vmul.f32 %v1643, 0.5
  %v1676 = vmul.f32 %v1644, 0.5
  %v1677 = vmul.f32 %v1645, 0.5
  %v1678 = vmul.f32 %v1646, 0.5
  %v1679 = vmul.f32 %v1647, 0.5
  %v1680 = vmul.f32 %v1648, 0.5
  %v1681 = vmul.f32 %v1649, 0.5
  %v1682 = vmul.f32 %v1650, 0.5
  %v1683 = vmul.f32 %v1651, 0.5
  %v1684 = vmul.f32 %v1652, 0.5
  %v1685 = vmul.f32 %v1653, 0.5
  %v1686 = vmul.f32 %v1654, 0.5
  %v1687 = vmul.f32 %v1655, 0.5
  %v1688 = vmul.f32 %v1656, 0.5
  %v1689 = vmul.f32 %v1657, 0.5
  %v1690 = vmul.f32 %v1658, 0.5
  %v1691 = vmul.f32 %v1659, 0.5
  %v1692 = vmul.f32 %v1660, 0.5
  %v1693 = vmul.f32 %v1661, 0.5
  %v1694 = vmul.f32 %v1662, 0.5
  %v1695 = vmul.f32 %v1663, 0.5
  %v1696 = vmul.f32 %v1664, 0.5
  %v1697 = vmul.f32 %v1665, 0.5
  %v1698 = vmul.f32 %v1666, 0.5
  %v1699 = vmul.f32 %v1667, 0.5
  %v1700 = vmul.f32 %v1668, 0.5
  %v1701 = vmul.f32 %v1669, 0.5
  %v1702 = vmul.f32 %v1670, 0.5
  %v1703 = vmul.f32 %v1671, 0.5
  %v1704 = vmul.f32 %v1672, 0.5
  %v1705 = vpack.c.bf16 %v1674, %v1673
  %v1706 = vpack.c.bf16 %v1676, %v1675
  %v1707 = vpack.c.bf16 %v1678, %v1677
  %v1708 = vpack.c.bf16 %v1680, %v1679
  %v1709 = vpack.c.bf16 %v1682, %v1681
  %v1710 = vpack.c.bf16 %v1684, %v1683
  %v1711 = vpack.c.bf16 %v1686, %v1685
  %v1712 = vpack.c.bf16 %v1688, %v1687
  %v1713 = vpack.c.bf16 %v1690, %v1689
  %v1714 = vpack.c.bf16 %v1692, %v1691
  %v1715 = vpack.c.bf16 %v1694, %v1693
  %v1716 = vpack.c.bf16 %v1696, %v1695
  %v1717 = vpack.c.bf16 %v1698, %v1697
  %v1718 = vpack.c.bf16 %v1700, %v1699
  %v1719 = vpack.c.bf16 %v1702, %v1701
  %v1720 = vpack.c.bf16 %v1704, %v1703
  %v1737 = vrot.slane %v1705, 3
  %v1738 = vrot.slane %v1706, 6
  %v1739 = vrot.slane %v1706, 1
  %v1740 = vrot.slane %v1707, 4
  %v1741 = vrot.slane %v1707, 7
  %v1742 = vrot.slane %v1708, 2
  %v1743 = vrot.slane %v1708, 5
  %v1744 = vrot.slane %v1709, 3
  %v1745 = vrot.slane %v1710, 6
  %v1746 = vrot.slane %v1710, 1
  %v1747 = vrot.slane %v1711, 4
  %v1748 = vrot.slane %v1711, 7
  %v1749 = vrot.slane %v1712, 2
  %v1750 = vrot.slane %v1712, 5
  %v1751 = vrot.slane %v1713, 3
  %v1752 = vrot.slane %v1714, 6
  %v1753 = vrot.slane %v1714, 1
  %v1754 = vrot.slane %v1715, 4
  %v1755 = vrot.slane %v1715, 7
  %v1756 = vrot.slane %v1716, 2
  %v1757 = vrot.slane %v1716, 5
  %v1758 = vrot.slane %v1717, 3
  %v1759 = vrot.slane %v1718, 6
  %v1760 = vrot.slane %v1718, 1
  %v1761 = vrot.slane %v1719, 4
  %v1762 = vrot.slane %v1719, 7
  %v1763 = vrot.slane %v1720, 2
  %v1764 = vrot.slane %v1720, 5
  %vm1765 = vcmask 1040384
  %v1768 = vsel %vm1765, %v1705, %v1737
  %vm1769 = vcmask 1042434
  %v1772 = vsel %vm1769, %v1738, %v1739
  %vm1773 = vcmask 1041408
  %v1774 = vsel %vm1773, %v1768, %v1772
  %vm1775 = vcmask 1044484
  %v1778 = vsel %vm1775, %v1740, %v1741
  %vm1779 = vcmask 1046534
  %v1782 = vsel %vm1779, %v1742, %v1743
  %vm1783 = vcmask 1045508
  %v1784 = vsel %vm1783, %v1778, %v1782
  %v1785 = vsel %vm872, %v1774, %v1784
  %v1788 = vsel %vm1765, %v1709, %v1744
  %v1791 = vsel %vm1769, %v1745, %v1746
  %v1792 = vsel %vm1773, %v1788, %v1791
  %v1795 = vsel %vm1775, %v1747, %v1748
  %v1798 = vsel %vm1779, %v1749, %v1750
  %v1799 = vsel %vm1783, %v1795, %v1798
  %v1800 = vsel %vm872, %v1792, %v1799
  %v1803 = vsel %vm1765, %v1713, %v1751
  %v1806 = vsel %vm1769, %v1752, %v1753
  %v1807 = vsel %vm1773, %v1803, %v1806
  %v1810 = vsel %vm1775, %v1754, %v1755
  %v1813 = vsel %vm1779, %v1756, %v1757
  %v1814 = vsel %vm1783, %v1810, %v1813
  %v1815 = vsel %vm872, %v1807, %v1814
  %v1818 = vsel %vm1765, %v1717, %v1758
  %v1821 = vsel %vm1769, %v1759, %v1760
  %v1822 = vsel %vm1773, %v1818, %v1821
  %v1825 = vsel %vm1775, %v1761, %v1762
  %v1828 = vsel %vm1779, %v1763, %v1764
  %v1829 = vsel %vm1783, %v1825, %v1828
  %v1830 = vsel %vm872, %v1822, %v1829
  %1835 = vst [vmem:[%s48] sm:$0xff] %v1785
  %1836 = vst [vmem:[%s48 + $0x8] sm:$0xff] %v1800
  %1837 = vst [vmem:[%s48 + $0x10] sm:$0xff] %v1815
  %1838 = vst [vmem:[%s48 + $0x18] sm:$0xff] %v1830
  %p1839 = scmp.lt.s32.totalorder %s11, 0
  %s1840 = scalar_select %p1839, %s11, 0
  %s1841 = smul.addr %s1840, 32
  %s1842 = scalar_lea.vmem %s7, %s1841
  // Predicated region
  $region30: #{solo_generator_forward.1} parent=0 // pred_check
    _
  $region31: #{solo_generator_forward.1} parent=0 // pred_check_branch
    %1844 = sbr.rel (0) target = $region33
  $region32: #{solo_generator_forward.1} parent=0 // pred_region
    _
  $region33: #{solo_generator_forward.1} parent=0 // pred_fallthru
    _
  // Predicated region
  $region34: #{solo_generator_forward.1} parent=0 // pred_check
    _
  $region35: #{solo_generator_forward.1} parent=0 // pred_check_branch
    %1846 = sbr.rel (0) target = $region37
  $region36: #{solo_generator_forward.1} parent=0 // pred_region
    %p1847 = scmp.lt.s32.totalorder %s11, 0
    %s1848 = scalar_select %p1847, %s11, 0
    %s1849 = smul.addr %s1848, 32
    %s1850 = scalar_lea.vmem %s7, %s1849
  $region37: #{solo_generator_forward.1} parent=0 // pred_fallthru
    _

</llo_original>
